<compile_context>
chip_gen: v5e
topology: v5e:2x2
jax: 0.10.0
libtpu: 0.0.40
codegen_flags: <defaults>
</compile_context>

<pallas_src>
import jax
import jax.numpy as jnp
import numpy as np
from jax import lax
from jax.experimental import pallas as pl
from jax.experimental.pallas import tpu as pltpu


def dpcnn_kernel(tok_ref, table_ref, wr_ref, br_ref, wc_ref, bc_ref,
                 wl_ref, bl_ref, out_ref,
                 emb_buf, pad_buf, pool_buf, sem):
    f32 = jnp.float32
    bf16 = jnp.bfloat16
    b = pl.program_id(0)
    S, _ = emb_buf.shape
    NFp = pad_buf.shape[1]

    # ---- embedding lookup: DMA-gather the S needed table rows from HBM ----
    for s in range(S):
        pltpu.make_async_copy(table_ref.at[tok_ref[b, s]],
                              emb_buf.at[s], sem.at[s]).start()
    for s in range(S):
        pltpu.make_async_copy(table_ref.at[tok_ref[b, s]],
                              emb_buf.at[s], sem.at[s]).wait()

    zero_bf = jnp.zeros((1, NFp), bf16)
    zero_f32 = jnp.zeros((1, NFp), f32)
    pad_buf[0:1, :] = zero_bf           # top zero-pad row, reused by every conv
    br = br_ref[...]                    # (1, NFp) f32
    bc = bc_ref[...]                    # (1, NFp) f32

    def conv_region(x_bf):
        # (S, E) bf16 -> (S-2, NFp) f32 ; fused 3-tap conv = 1 MXU matmul.
        H = x_bf.shape[0]
        y = jnp.dot(x_bf, wr_ref[...], preferred_element_type=f32)   # (H, 3*NFp)
        return (y[0:H - 2, 0:NFp] + y[1:H - 1, NFp:2 * NFp]
                + y[2:H, 2 * NFp:3 * NFp] + br)

    def conv_pad_relu(x):
        # ZeroPad2d((0,0,1,1)) + ReLU + Conv2d((3,1)) ; (H, NFp) f32 -> (H, NFp) f32.
        H = x.shape[0]
        pad_buf[1:H + 1, :] = jnp.maximum(x, 0.0).astype(bf16)
        pad_buf[H + 1:H + 2, :] = zero_bf
        xp = pad_buf[0:H + 2, :]                                      # (H+2, NFp) bf16
        y = jnp.dot(xp, wc_ref[...], preferred_element_type=f32)     # (H+2, 3*NFp)
        return (y[0:H, 0:NFp] + y[1:H + 1, NFp:2 * NFp]
                + y[2:H + 2, 2 * NFp:3 * NFp] + bc)

    def pool(x):
        # ZeroPad2d((0,0,0,1)) + MaxPool2d((3,1), stride=2) ; (H, NFp) -> (out_h, NFp).
        H = x.shape[0]
        out_h = (H - 2) // 2 + 1
        pool_buf[0:H, :] = x
        if 2 * out_h == H:              # last window touches the zero-pad row
            pool_buf[H:H + 1, :] = zero_f32
        if out_h == 1:
            a = pool_buf[0:1, :]
            c1 = pool_buf[1:2, :]
            c2 = pool_buf[2:3, :]
        else:
            a = pool_buf[pl.ds(0, out_h, stride=2), :]
            c1 = pool_buf[pl.ds(1, out_h, stride=2), :]
            c2 = pool_buf[pl.ds(2, out_h, stride=2), :]
        return jnp.maximum(jnp.maximum(a, c1), c2)

    emb = emb_buf[...].astype(bf16)                 # (S, E) MXU operand
    x = conv_region(emb)                            # (S-2, NFp)
    x = conv_pad_relu(x)
    x = conv_pad_relu(x)
    while x.shape[0] > 2:                           # static shapes -> trace-time loop
        px = pool(x)
        y = conv_pad_relu(px)
        y = conv_pad_relu(y)
        x = y + px

    row0 = x[0:1, :]
    row1 = row0 if x.shape[0] == 1 else x[1:2, :]
    feat = jnp.concatenate([row0, row1], axis=1).astype(bf16)         # (1, 2*NFp)
    logits = jnp.dot(feat, wl_ref[...], preferred_element_type=f32) + bl_ref[...]
    out_ref[0] = logits                             # single lane-dense (1, NCp) store


def dpcnn_forward(tokens, table, wr, br, wc, bc, wl, bl, num_class):
    B, S = tokens.shape
    V, E = table.shape
    NFp = br.shape[1]
    NCp = bl.shape[1]

    grid_spec = pltpu.PrefetchScalarGridSpec(
        num_scalar_prefetch=1,                      # tokens -> SMEM
        grid=(B,),
        in_specs=[
            pl.BlockSpec(memory_space=pl.ANY),                    # table stays in HBM
            pl.BlockSpec((E, 3 * NFp), lambda b, tok: (0, 0)),    # fused conv_region W
            pl.BlockSpec((1, NFp), lambda b, tok: (0, 0)),        # conv_region bias
            pl.BlockSpec((NFp, 3 * NFp), lambda b, tok: (0, 0)),  # fused conv W
            pl.BlockSpec((1, NFp), lambda b, tok: (0, 0)),        # conv bias
            pl.BlockSpec((2 * NFp, NCp), lambda b, tok: (0, 0)),  # linear W
            pl.BlockSpec((1, NCp), lambda b, tok: (0, 0)),        # linear bias
        ],
        out_specs=pl.BlockSpec((1, 1, NCp), lambda b, tok: (b, 0, 0)),
        scratch_shapes=[
            pltpu.VMEM((S, E), jnp.float32),        # gathered embedding rows
            pltpu.VMEM((S, NFp), jnp.bfloat16),     # zero-padded relu slab
            pltpu.VMEM((S, NFp), jnp.float32),      # max-pool padded slab
            pltpu.SemaphoreType.DMA((S,)),
        ],
    )
    out = pl.pallas_call(
        dpcnn_kernel,
        out_shape=jax.ShapeDtypeStruct((B, 1, NCp), jnp.float32),
        grid_spec=grid_spec,
        compiler_params=pltpu.CompilerParams(
            dimension_semantics=("parallel",),
            vmem_limit_bytes=32 * 1024 * 1024,
        ),
    )(tokens, table, wr, br, wc, bc, wl, bl)
    return out[:, 0, :num_class]


def ref_forward(tokens, table, w_region, b_region, w_conv, b_conv, w_lin, b_lin):
    # Pure-JAX f32 reference mirroring the PyTorch NCHW semantics.
    B = tokens.shape[0]
    NF = w_conv.shape[0]

    def conv2d(x, w, b):
        y = lax.conv_general_dilated(
            x, w, window_strides=(1, 1), padding='VALID',
            dimension_numbers=('NCHW', 'OIHW', 'NCHW'),
            precision=lax.Precision.HIGHEST)
        return y + b[None, :, None, None]

    pad_conv = lambda t: jnp.pad(t, ((0, 0), (0, 0), (1, 1), (0, 0)))
    pad_pool = lambda t: jnp.pad(t, ((0, 0), (0, 0), (0, 1), (0, 0)))
    pool = lambda t: lax.reduce_window(t, -jnp.inf, lax.max,
                                       (1, 1, 3, 1), (1, 1, 2, 1), 'VALID')

    emb = table[tokens]                       # (B, S, E)
    x = emb[:, None, :, :]                    # (B, 1, S, E)
    y = conv2d(x, w_region, b_region)         # (B, NF, S-2, 1)
    y = conv2d(jnp.maximum(pad_conv(y), 0.0), w_conv, b_conv)
    y = conv2d(jnp.maximum(pad_conv(y), 0.0), w_conv, b_conv)
    while y.shape[2] > 2:
        px = pool(pad_pool(y))
        z = conv2d(jnp.maximum(pad_conv(px), 0.0), w_conv, b_conv)
        z = conv2d(jnp.maximum(pad_conv(z), 0.0), w_conv, b_conv)
        y = z + px
    if y.shape[2] == 1:
        yy = y[:, :, 0, 0]
        yy = jnp.stack([yy, yy], axis=2)
        feat = yy.reshape(B, 2 * NF)
    else:
        feat = y.reshape(B, 2 * NF)
    return jnp.dot(feat, w_lin.T, precision=lax.Precision.HIGHEST) + b_lin


if __name__ == "__main__":
    B, S, V, E, NF, NC = 2, 8, 32, 128, 12, 4
    NFp, NCp = 128, 128                       # lane padding for filters / classes

    key = jax.random.PRNGKey(0)
    ks = jax.random.split(key, 8)
    table = jax.random.normal(ks[0], (V, E), jnp.float32) * 0.1
    table = table.at[0].set(0.0)              # padding_idx=0
    w_region = jax.random.normal(ks[1], (NF, 1, 3, E), jnp.float32) * 0.05
    b_region = jax.random.normal(ks[2], (NF,), jnp.float32) * 0.05
    w_conv = jax.random.normal(ks[3], (NF, NF, 3, 1), jnp.float32) * 0.05
    b_conv = jax.random.normal(ks[4], (NF,), jnp.float32) * 0.05
    w_lin = jax.random.normal(ks[5], (NC, 2 * NF), jnp.float32) * 0.05
    b_lin = jax.random.normal(ks[6], (NC,), jnp.float32) * 0.05
    tokens = jax.random.randint(ks[7], (B, S), 0, V, dtype=jnp.int32)

    # ---- kernel-layout params: fused taps, lane padding, bf16 MXU operands ----
    wr = jnp.transpose(w_region[:, 0], (2, 1, 0))              # (E, 3, NF)
    wr = jnp.pad(wr, ((0, 0), (0, 0), (0, NFp - NF)))
    wr = wr.reshape(E, 3 * NFp).astype(jnp.bfloat16)
    br = jnp.pad(b_region, (0, NFp - NF)).reshape(1, NFp)      # f32

    wc = jnp.transpose(w_conv[:, :, :, 0], (1, 2, 0))          # (NF_in, 3, NF_out)
    wc = jnp.pad(wc, ((0, NFp - NF), (0, 0), (0, NFp - NF)))
    wc = wc.reshape(NFp, 3 * NFp).astype(jnp.bfloat16)
    bc = jnp.pad(b_conv, (0, NFp - NF)).reshape(1, NFp)        # f32

    wl = jnp.transpose(w_lin.reshape(NC, NF, 2), (2, 1, 0))    # (2, NF, NC)
    wl = jnp.pad(wl, ((0, 0), (0, NFp - NF), (0, NCp - NC)))
    wl = wl.reshape(2 * NFp, NCp).astype(jnp.bfloat16)
    bl = jnp.pad(b_lin, (0, NCp - NC)).reshape(1, NCp)         # f32

    out = dpcnn_forward(tokens, table, wr, br, wc, bc, wl, bl, NC)
    out = jax.block_until_ready(out)

    ref = ref_forward(tokens, table, w_region, b_region, w_conv, b_conv,
                      w_lin, b_lin)
    assert out.shape == (B, NC)
    # bf16 MXU operands -> slightly looser tolerance than the f32 reference.
    np.testing.assert_allclose(np.asarray(out), np.asarray(ref),
                               rtol=2e-2, atol=2e-2)
    print("KERNEL_OK")
</pallas_src>

<mosaic_0001>
module attributes {stable_mosaic.version = 11 : i64} {
  func.func @dpcnn_kernel(%arg0: i32, %arg1: memref<2x8xi32, #tpu.memory_space<smem>>, %arg2: memref<32x128xf32, #tpu.memory_space<any>>, %arg3: memref<128x384xbf16, #tpu.memory_space<vmem>>, %arg4: memref<1x128xf32, #tpu.memory_space<vmem>>, %arg5: memref<128x384xbf16, #tpu.memory_space<vmem>>, %arg6: memref<1x128xf32, #tpu.memory_space<vmem>>, %arg7: memref<256x128xbf16, #tpu.memory_space<vmem>>, %arg8: memref<1x128xf32, #tpu.memory_space<vmem>>, %arg9: memref<1x1x128xf32, #tpu.memory_space<vmem>>, %arg10: memref<8x128xf32, #tpu.memory_space<vmem>>, %arg11: memref<8x128xbf16, #tpu.memory_space<vmem>>, %arg12: memref<8x128xf32, #tpu.memory_space<vmem>>, %arg13: memref<8x!tpu.dma_semaphore, #tpu.memory_space<semaphore_mem>>) attributes {dimension_semantics = [#tpu.dimension_semantics<parallel>], iteration_bounds = array<i64: 2>, scalar_prefetch = 1 : i64, scratch_operands = 4 : i64, tpu.core_type = #tpu.core_type<tc>, window_params = [{}, {pipeline_mode = #tpu.pipeline_mode<synchronous>, transform_indices = @transform_1, window_bounds = array<i64: 128, 384>}, {pipeline_mode = #tpu.pipeline_mode<synchronous>, transform_indices = @transform_2, window_bounds = array<i64: 1, 128>}, {pipeline_mode = #tpu.pipeline_mode<synchronous>, transform_indices = @transform_3, window_bounds = array<i64: 128, 384>}, {pipeline_mode = #tpu.pipeline_mode<synchronous>, transform_indices = @transform_4, window_bounds = array<i64: 1, 128>}, {pipeline_mode = #tpu.pipeline_mode<synchronous>, transform_indices = @transform_5, window_bounds = array<i64: 256, 128>}, {pipeline_mode = #tpu.pipeline_mode<synchronous>, transform_indices = @transform_6, window_bounds = array<i64: 1, 128>}, {transform_indices = @transform_7, window_bounds = array<i64: 1, 1, 128>}]} {
    %0 = arith.index_cast %arg0 : i32 to index
    %c0 = arith.constant 0 : index
    %1 = memref.load %arg1[%0, %c0] : memref<2x8xi32, #tpu.memory_space<smem>>
    %c0_i32 = arith.constant 0 : i32
    %c0_i32_0 = arith.constant 0 : i32
    %c0_i32_1 = arith.constant 0 : i32
    %2 = tpu.memref_slice %arg2[%1, %c0_i32_1] : memref<32x128xf32, #tpu.memory_space<any>> -> memref<1x128xf32, #tpu.memory_space<any>>
    %3 = tpu.memref_squeeze %2 : memref<1x128xf32, #tpu.memory_space<any>> -> memref<128xf32, #tpu.memory_space<any>>
    %c0_i32_2 = arith.constant 0 : i32
    %4 = tpu.memref_slice %arg10[%c0_i32, %c0_i32_2] : memref<8x128xf32, #tpu.memory_space<vmem>> -> memref<1x128xf32, #tpu.memory_space<vmem>>
    %5 = tpu.memref_squeeze %4 : memref<1x128xf32, #tpu.memory_space<vmem>> -> memref<128xf32, #tpu.memory_space<vmem>>
    %6 = tpu.memref_slice %arg13[%c0_i32_0] : memref<8x!tpu.dma_semaphore, #tpu.memory_space<semaphore_mem>> -> memref<1x!tpu.dma_semaphore, #tpu.memory_space<semaphore_mem>>
    %7 = tpu.memref_squeeze %6 : memref<1x!tpu.dma_semaphore, #tpu.memory_space<semaphore_mem>> -> memref<!tpu.dma_semaphore, #tpu.memory_space<semaphore_mem>>
    tpu.enqueue_dma source(%3 : memref<128xf32, #tpu.memory_space<any>>) target(%5 : memref<128xf32, #tpu.memory_space<vmem>>) target_semaphore(%7 : memref<!tpu.dma_semaphore, #tpu.memory_space<semaphore_mem>>)
    %8 = arith.index_cast %arg0 : i32 to index
    %c1 = arith.constant 1 : index
    %9 = memref.load %arg1[%8, %c1] : memref<2x8xi32, #tpu.memory_space<smem>>
    %c1_i32 = arith.constant 1 : i32
    %c1_i32_3 = arith.constant 1 : i32
    %c0_i32_4 = arith.constant 0 : i32
    %10 = tpu.memref_slice %arg2[%9, %c0_i32_4] : memref<32x128xf32, #tpu.memory_space<any>> -> memref<1x128xf32, #tpu.memory_space<any>>
    %11 = tpu.memref_squeeze %10 : memref<1x128xf32, #tpu.memory_space<any>> -> memref<128xf32, #tpu.memory_space<any>>
    %c0_i32_5 = arith.constant 0 : i32
    %12 = tpu.memref_slice %arg10[%c1_i32, %c0_i32_5] : memref<8x128xf32, #tpu.memory_space<vmem>> -> memref<1x128xf32, #tpu.memory_space<vmem>>
    %13 = tpu.memref_squeeze %12 : memref<1x128xf32, #tpu.memory_space<vmem>> -> memref<128xf32, #tpu.memory_space<vmem>>
    %14 = tpu.memref_slice %arg13[%c1_i32_3] : memref<8x!tpu.dma_semaphore, #tpu.memory_space<semaphore_mem>> -> memref<1x!tpu.dma_semaphore, #tpu.memory_space<semaphore_mem>>
    %15 = tpu.memref_squeeze %14 : memref<1x!tpu.dma_semaphore, #tpu.memory_space<semaphore_mem>> -> memref<!tpu.dma_semaphore, #tpu.memory_space<semaphore_mem>>
    tpu.enqueue_dma source(%11 : memref<128xf32, #tpu.memory_space<any>>) target(%13 : memref<128xf32, #tpu.memory_space<vmem>>) target_semaphore(%15 : memref<!tpu.dma_semaphore, #tpu.memory_space<semaphore_mem>>)
    %16 = arith.index_cast %arg0 : i32 to index
    %c2 = arith.constant 2 : index
    %17 = memref.load %arg1[%16, %c2] : memref<2x8xi32, #tpu.memory_space<smem>>
    %c2_i32 = arith.constant 2 : i32
    %c2_i32_6 = arith.constant 2 : i32
    %c0_i32_7 = arith.constant 0 : i32
    %18 = tpu.memref_slice %arg2[%17, %c0_i32_7] : memref<32x128xf32, #tpu.memory_space<any>> -> memref<1x128xf32, #tpu.memory_space<any>>
    %19 = tpu.memref_squeeze %18 : memref<1x128xf32, #tpu.memory_space<any>> -> memref<128xf32, #tpu.memory_space<any>>
    %c0_i32_8 = arith.constant 0 : i32
    %20 = tpu.memref_slice %arg10[%c2_i32, %c0_i32_8] : memref<8x128xf32, #tpu.memory_space<vmem>> -> memref<1x128xf32, #tpu.memory_space<vmem>>
    %21 = tpu.memref_squeeze %20 : memref<1x128xf32, #tpu.memory_space<vmem>> -> memref<128xf32, #tpu.memory_space<vmem>>
    %22 = tpu.memref_slice %arg13[%c2_i32_6] : memref<8x!tpu.dma_semaphore, #tpu.memory_space<semaphore_mem>> -> memref<1x!tpu.dma_semaphore, #tpu.memory_space<semaphore_mem>>
    %23 = tpu.memref_squeeze %22 : memref<1x!tpu.dma_semaphore, #tpu.memory_space<semaphore_mem>> -> memref<!tpu.dma_semaphore, #tpu.memory_space<semaphore_mem>>
    tpu.enqueue_dma source(%19 : memref<128xf32, #tpu.memory_space<any>>) target(%21 : memref<128xf32, #tpu.memory_space<vmem>>) target_semaphore(%23 : memref<!tpu.dma_semaphore, #tpu.memory_space<semaphore_mem>>)
    %24 = arith.index_cast %arg0 : i32 to index
    %c3 = arith.constant 3 : index
    %25 = memref.load %arg1[%24, %c3] : memref<2x8xi32, #tpu.memory_space<smem>>
    %c3_i32 = arith.constant 3 : i32
    %c3_i32_9 = arith.constant 3 : i32
    %c0_i32_10 = arith.constant 0 : i32
    %26 = tpu.memref_slice %arg2[%25, %c0_i32_10] : memref<32x128xf32, #tpu.memory_space<any>> -> memref<1x128xf32, #tpu.memory_space<any>>
    %27 = tpu.memref_squeeze %26 : memref<1x128xf32, #tpu.memory_space<any>> -> memref<128xf32, #tpu.memory_space<any>>
    %c0_i32_11 = arith.constant 0 : i32
    %28 = tpu.memref_slice %arg10[%c3_i32, %c0_i32_11] : memref<8x128xf32, #tpu.memory_space<vmem>> -> memref<1x128xf32, #tpu.memory_space<vmem>>
    %29 = tpu.memref_squeeze %28 : memref<1x128xf32, #tpu.memory_space<vmem>> -> memref<128xf32, #tpu.memory_space<vmem>>
    %30 = tpu.memref_slice %arg13[%c3_i32_9] : memref<8x!tpu.dma_semaphore, #tpu.memory_space<semaphore_mem>> -> memref<1x!tpu.dma_semaphore, #tpu.memory_space<semaphore_mem>>
    %31 = tpu.memref_squeeze %30 : memref<1x!tpu.dma_semaphore, #tpu.memory_space<semaphore_mem>> -> memref<!tpu.dma_semaphore, #tpu.memory_space<semaphore_mem>>
    tpu.enqueue_dma source(%27 : memref<128xf32, #tpu.memory_space<any>>) target(%29 : memref<128xf32, #tpu.memory_space<vmem>>) target_semaphore(%31 : memref<!tpu.dma_semaphore, #tpu.memory_space<semaphore_mem>>)
    %32 = arith.index_cast %arg0 : i32 to index
    %c4 = arith.constant 4 : index
    %33 = memref.load %arg1[%32, %c4] : memref<2x8xi32, #tpu.memory_space<smem>>
    %c4_i32 = arith.constant 4 : i32
    %c4_i32_12 = arith.constant 4 : i32
    %c0_i32_13 = arith.constant 0 : i32
    %34 = tpu.memref_slice %arg2[%33, %c0_i32_13] : memref<32x128xf32, #tpu.memory_space<any>> -> memref<1x128xf32, #tpu.memory_space<any>>
    %35 = tpu.memref_squeeze %34 : memref<1x128xf32, #tpu.memory_space<any>> -> memref<128xf32, #tpu.memory_space<any>>
    %c0_i32_14 = arith.constant 0 : i32
    %36 = tpu.memref_slice %arg10[%c4_i32, %c0_i32_14] : memref<8x128xf32, #tpu.memory_space<vmem>> -> memref<1x128xf32, #tpu.memory_space<vmem>>
    %37 = tpu.memref_squeeze %36 : memref<1x128xf32, #tpu.memory_space<vmem>> -> memref<128xf32, #tpu.memory_space<vmem>>
    %38 = tpu.memref_slice %arg13[%c4_i32_12] : memref<8x!tpu.dma_semaphore, #tpu.memory_space<semaphore_mem>> -> memref<1x!tpu.dma_semaphore, #tpu.memory_space<semaphore_mem>>
    %39 = tpu.memref_squeeze %38 : memref<1x!tpu.dma_semaphore, #tpu.memory_space<semaphore_mem>> -> memref<!tpu.dma_semaphore, #tpu.memory_space<semaphore_mem>>
    tpu.enqueue_dma source(%35 : memref<128xf32, #tpu.memory_space<any>>) target(%37 : memref<128xf32, #tpu.memory_space<vmem>>) target_semaphore(%39 : memref<!tpu.dma_semaphore, #tpu.memory_space<semaphore_mem>>)
    %40 = arith.index_cast %arg0 : i32 to index
    %c5 = arith.constant 5 : index
    %41 = memref.load %arg1[%40, %c5] : memref<2x8xi32, #tpu.memory_space<smem>>
    %c5_i32 = arith.constant 5 : i32
    %c5_i32_15 = arith.constant 5 : i32
    %c0_i32_16 = arith.constant 0 : i32
    %42 = tpu.memref_slice %arg2[%41, %c0_i32_16] : memref<32x128xf32, #tpu.memory_space<any>> -> memref<1x128xf32, #tpu.memory_space<any>>
    %43 = tpu.memref_squeeze %42 : memref<1x128xf32, #tpu.memory_space<any>> -> memref<128xf32, #tpu.memory_space<any>>
    %c0_i32_17 = arith.constant 0 : i32
    %44 = tpu.memref_slice %arg10[%c5_i32, %c0_i32_17] : memref<8x128xf32, #tpu.memory_space<vmem>> -> memref<1x128xf32, #tpu.memory_space<vmem>>
    %45 = tpu.memref_squeeze %44 : memref<1x128xf32, #tpu.memory_space<vmem>> -> memref<128xf32, #tpu.memory_space<vmem>>
    %46 = tpu.memref_slice %arg13[%c5_i32_15] : memref<8x!tpu.dma_semaphore, #tpu.memory_space<semaphore_mem>> -> memref<1x!tpu.dma_semaphore, #tpu.memory_space<semaphore_mem>>
    %47 = tpu.memref_squeeze %46 : memref<1x!tpu.dma_semaphore, #tpu.memory_space<semaphore_mem>> -> memref<!tpu.dma_semaphore, #tpu.memory_space<semaphore_mem>>
    tpu.enqueue_dma source(%43 : memref<128xf32, #tpu.memory_space<any>>) target(%45 : memref<128xf32, #tpu.memory_space<vmem>>) target_semaphore(%47 : memref<!tpu.dma_semaphore, #tpu.memory_space<semaphore_mem>>)
    %48 = arith.index_cast %arg0 : i32 to index
    %c6 = arith.constant 6 : index
    %49 = memref.load %arg1[%48, %c6] : memref<2x8xi32, #tpu.memory_space<smem>>
    %c6_i32 = arith.constant 6 : i32
    %c6_i32_18 = arith.constant 6 : i32
    %c0_i32_19 = arith.constant 0 : i32
    %50 = tpu.memref_slice %arg2[%49, %c0_i32_19] : memref<32x128xf32, #tpu.memory_space<any>> -> memref<1x128xf32, #tpu.memory_space<any>>
    %51 = tpu.memref_squeeze %50 : memref<1x128xf32, #tpu.memory_space<any>> -> memref<128xf32, #tpu.memory_space<any>>
    %c0_i32_20 = arith.constant 0 : i32
    %52 = tpu.memref_slice %arg10[%c6_i32, %c0_i32_20] : memref<8x128xf32, #tpu.memory_space<vmem>> -> memref<1x128xf32, #tpu.memory_space<vmem>>
    %53 = tpu.memref_squeeze %52 : memref<1x128xf32, #tpu.memory_space<vmem>> -> memref<128xf32, #tpu.memory_space<vmem>>
    %54 = tpu.memref_slice %arg13[%c6_i32_18] : memref<8x!tpu.dma_semaphore, #tpu.memory_space<semaphore_mem>> -> memref<1x!tpu.dma_semaphore, #tpu.memory_space<semaphore_mem>>
    %55 = tpu.memref_squeeze %54 : memref<1x!tpu.dma_semaphore, #tpu.memory_space<semaphore_mem>> -> memref<!tpu.dma_semaphore, #tpu.memory_space<semaphore_mem>>
    tpu.enqueue_dma source(%51 : memref<128xf32, #tpu.memory_space<any>>) target(%53 : memref<128xf32, #tpu.memory_space<vmem>>) target_semaphore(%55 : memref<!tpu.dma_semaphore, #tpu.memory_space<semaphore_mem>>)
    %56 = arith.index_cast %arg0 : i32 to index
    %c7 = arith.constant 7 : index
    %57 = memref.load %arg1[%56, %c7] : memref<2x8xi32, #tpu.memory_space<smem>>
    %c7_i32 = arith.constant 7 : i32
    %c7_i32_21 = arith.constant 7 : i32
    %c0_i32_22 = arith.constant 0 : i32
    %58 = tpu.memref_slice %arg2[%57, %c0_i32_22] : memref<32x128xf32, #tpu.memory_space<any>> -> memref<1x128xf32, #tpu.memory_space<any>>
    %59 = tpu.memref_squeeze %58 : memref<1x128xf32, #tpu.memory_space<any>> -> memref<128xf32, #tpu.memory_space<any>>
    %c0_i32_23 = arith.constant 0 : i32
    %60 = tpu.memref_slice %arg10[%c7_i32, %c0_i32_23] : memref<8x128xf32, #tpu.memory_space<vmem>> -> memref<1x128xf32, #tpu.memory_space<vmem>>
    %61 = tpu.memref_squeeze %60 : memref<1x128xf32, #tpu.memory_space<vmem>> -> memref<128xf32, #tpu.memory_space<vmem>>
    %62 = tpu.memref_slice %arg13[%c7_i32_21] : memref<8x!tpu.dma_semaphore, #tpu.memory_space<semaphore_mem>> -> memref<1x!tpu.dma_semaphore, #tpu.memory_space<semaphore_mem>>
    %63 = tpu.memref_squeeze %62 : memref<1x!tpu.dma_semaphore, #tpu.memory_space<semaphore_mem>> -> memref<!tpu.dma_semaphore, #tpu.memory_space<semaphore_mem>>
    tpu.enqueue_dma source(%59 : memref<128xf32, #tpu.memory_space<any>>) target(%61 : memref<128xf32, #tpu.memory_space<vmem>>) target_semaphore(%63 : memref<!tpu.dma_semaphore, #tpu.memory_space<semaphore_mem>>)
    %64 = arith.index_cast %arg0 : i32 to index
    %c0_24 = arith.constant 0 : index
    %65 = memref.load %arg1[%64, %c0_24] : memref<2x8xi32, #tpu.memory_space<smem>>
    %c0_i32_25 = arith.constant 0 : i32
    %c0_i32_26 = arith.constant 0 : i32
    %c0_i32_27 = arith.constant 0 : i32
    %66 = tpu.memref_slice %arg2[%65, %c0_i32_27] : memref<32x128xf32, #tpu.memory_space<any>> -> memref<1x128xf32, #tpu.memory_space<any>>
    %67 = tpu.memref_squeeze %66 : memref<1x128xf32, #tpu.memory_space<any>> -> memref<128xf32, #tpu.memory_space<any>>
    %c0_i32_28 = arith.constant 0 : i32
    %68 = tpu.memref_slice %arg10[%c0_i32_25, %c0_i32_28] : memref<8x128xf32, #tpu.memory_space<vmem>> -> memref<1x128xf32, #tpu.memory_space<vmem>>
    %69 = tpu.memref_squeeze %68 : memref<1x128xf32, #tpu.memory_space<vmem>> -> memref<128xf32, #tpu.memory_space<vmem>>
    %70 = tpu.memref_slice %arg13[%c0_i32_26] : memref<8x!tpu.dma_semaphore, #tpu.memory_space<semaphore_mem>> -> memref<1x!tpu.dma_semaphore, #tpu.memory_space<semaphore_mem>>
    %71 = tpu.memref_squeeze %70 : memref<1x!tpu.dma_semaphore, #tpu.memory_space<semaphore_mem>> -> memref<!tpu.dma_semaphore, #tpu.memory_space<semaphore_mem>>
    tpu.wait_dma2 semaphore(%71 : memref<!tpu.dma_semaphore, #tpu.memory_space<semaphore_mem>>) src(%67 : memref<128xf32, #tpu.memory_space<any>>) dst(%69 : memref<128xf32, #tpu.memory_space<vmem>>)
    %72 = arith.index_cast %arg0 : i32 to index
    %c1_29 = arith.constant 1 : index
    %73 = memref.load %arg1[%72, %c1_29] : memref<2x8xi32, #tpu.memory_space<smem>>
    %c1_i32_30 = arith.constant 1 : i32
    %c1_i32_31 = arith.constant 1 : i32
    %c0_i32_32 = arith.constant 0 : i32
    %74 = tpu.memref_slice %arg2[%73, %c0_i32_32] : memref<32x128xf32, #tpu.memory_space<any>> -> memref<1x128xf32, #tpu.memory_space<any>>
    %75 = tpu.memref_squeeze %74 : memref<1x128xf32, #tpu.memory_space<any>> -> memref<128xf32, #tpu.memory_space<any>>
    %c0_i32_33 = arith.constant 0 : i32
    %76 = tpu.memref_slice %arg10[%c1_i32_30, %c0_i32_33] : memref<8x128xf32, #tpu.memory_space<vmem>> -> memref<1x128xf32, #tpu.memory_space<vmem>>
    %77 = tpu.memref_squeeze %76 : memref<1x128xf32, #tpu.memory_space<vmem>> -> memref<128xf32, #tpu.memory_space<vmem>>
    %78 = tpu.memref_slice %arg13[%c1_i32_31] : memref<8x!tpu.dma_semaphore, #tpu.memory_space<semaphore_mem>> -> memref<1x!tpu.dma_semaphore, #tpu.memory_space<semaphore_mem>>
    %79 = tpu.memref_squeeze %78 : memref<1x!tpu.dma_semaphore, #tpu.memory_space<semaphore_mem>> -> memref<!tpu.dma_semaphore, #tpu.memory_space<semaphore_mem>>
    tpu.wait_dma2 semaphore(%79 : memref<!tpu.dma_semaphore, #tpu.memory_space<semaphore_mem>>) src(%75 : memref<128xf32, #tpu.memory_space<any>>) dst(%77 : memref<128xf32, #tpu.memory_space<vmem>>)
    %80 = arith.index_cast %arg0 : i32 to index
    %c2_34 = arith.constant 2 : index
    %81 = memref.load %arg1[%80, %c2_34] : memref<2x8xi32, #tpu.memory_space<smem>>
    %c2_i32_35 = arith.constant 2 : i32
    %c2_i32_36 = arith.constant 2 : i32
    %c0_i32_37 = arith.constant 0 : i32
    %82 = tpu.memref_slice %arg2[%81, %c0_i32_37] : memref<32x128xf32, #tpu.memory_space<any>> -> memref<1x128xf32, #tpu.memory_space<any>>
    %83 = tpu.memref_squeeze %82 : memref<1x128xf32, #tpu.memory_space<any>> -> memref<128xf32, #tpu.memory_space<any>>
    %c0_i32_38 = arith.constant 0 : i32
    %84 = tpu.memref_slice %arg10[%c2_i32_35, %c0_i32_38] : memref<8x128xf32, #tpu.memory_space<vmem>> -> memref<1x128xf32, #tpu.memory_space<vmem>>
    %85 = tpu.memref_squeeze %84 : memref<1x128xf32, #tpu.memory_space<vmem>> -> memref<128xf32, #tpu.memory_space<vmem>>
    %86 = tpu.memref_slice %arg13[%c2_i32_36] : memref<8x!tpu.dma_semaphore, #tpu.memory_space<semaphore_mem>> -> memref<1x!tpu.dma_semaphore, #tpu.memory_space<semaphore_mem>>
    %87 = tpu.memref_squeeze %86 : memref<1x!tpu.dma_semaphore, #tpu.memory_space<semaphore_mem>> -> memref<!tpu.dma_semaphore, #tpu.memory_space<semaphore_mem>>
    tpu.wait_dma2 semaphore(%87 : memref<!tpu.dma_semaphore, #tpu.memory_space<semaphore_mem>>) src(%83 : memref<128xf32, #tpu.memory_space<any>>) dst(%85 : memref<128xf32, #tpu.memory_space<vmem>>)
    %88 = arith.index_cast %arg0 : i32 to index
    %c3_39 = arith.constant 3 : index
    %89 = memref.load %arg1[%88, %c3_39] : memref<2x8xi32, #tpu.memory_space<smem>>
    %c3_i32_40 = arith.constant 3 : i32
    %c3_i32_41 = arith.constant 3 : i32
    %c0_i32_42 = arith.constant 0 : i32
    %90 = tpu.memref_slice %arg2[%89, %c0_i32_42] : memref<32x128xf32, #tpu.memory_space<any>> -> memref<1x128xf32, #tpu.memory_space<any>>
    %91 = tpu.memref_squeeze %90 : memref<1x128xf32, #tpu.memory_space<any>> -> memref<128xf32, #tpu.memory_space<any>>
    %c0_i32_43 = arith.constant 0 : i32
    %92 = tpu.memref_slice %arg10[%c3_i32_40, %c0_i32_43] : memref<8x128xf32, #tpu.memory_space<vmem>> -> memref<1x128xf32, #tpu.memory_space<vmem>>
    %93 = tpu.memref_squeeze %92 : memref<1x128xf32, #tpu.memory_space<vmem>> -> memref<128xf32, #tpu.memory_space<vmem>>
    %94 = tpu.memref_slice %arg13[%c3_i32_41] : memref<8x!tpu.dma_semaphore, #tpu.memory_space<semaphore_mem>> -> memref<1x!tpu.dma_semaphore, #tpu.memory_space<semaphore_mem>>
    %95 = tpu.memref_squeeze %94 : memref<1x!tpu.dma_semaphore, #tpu.memory_space<semaphore_mem>> -> memref<!tpu.dma_semaphore, #tpu.memory_space<semaphore_mem>>
    tpu.wait_dma2 semaphore(%95 : memref<!tpu.dma_semaphore, #tpu.memory_space<semaphore_mem>>) src(%91 : memref<128xf32, #tpu.memory_space<any>>) dst(%93 : memref<128xf32, #tpu.memory_space<vmem>>)
    %96 = arith.index_cast %arg0 : i32 to index
    %c4_44 = arith.constant 4 : index
    %97 = memref.load %arg1[%96, %c4_44] : memref<2x8xi32, #tpu.memory_space<smem>>
    %c4_i32_45 = arith.constant 4 : i32
    %c4_i32_46 = arith.constant 4 : i32
    %c0_i32_47 = arith.constant 0 : i32
    %98 = tpu.memref_slice %arg2[%97, %c0_i32_47] : memref<32x128xf32, #tpu.memory_space<any>> -> memref<1x128xf32, #tpu.memory_space<any>>
    %99 = tpu.memref_squeeze %98 : memref<1x128xf32, #tpu.memory_space<any>> -> memref<128xf32, #tpu.memory_space<any>>
    %c0_i32_48 = arith.constant 0 : i32
    %100 = tpu.memref_slice %arg10[%c4_i32_45, %c0_i32_48] : memref<8x128xf32, #tpu.memory_space<vmem>> -> memref<1x128xf32, #tpu.memory_space<vmem>>
    %101 = tpu.memref_squeeze %100 : memref<1x128xf32, #tpu.memory_space<vmem>> -> memref<128xf32, #tpu.memory_space<vmem>>
    %102 = tpu.memref_slice %arg13[%c4_i32_46] : memref<8x!tpu.dma_semaphore, #tpu.memory_space<semaphore_mem>> -> memref<1x!tpu.dma_semaphore, #tpu.memory_space<semaphore_mem>>
    %103 = tpu.memref_squeeze %102 : memref<1x!tpu.dma_semaphore, #tpu.memory_space<semaphore_mem>> -> memref<!tpu.dma_semaphore, #tpu.memory_space<semaphore_mem>>
    tpu.wait_dma2 semaphore(%103 : memref<!tpu.dma_semaphore, #tpu.memory_space<semaphore_mem>>) src(%99 : memref<128xf32, #tpu.memory_space<any>>) dst(%101 : memref<128xf32, #tpu.memory_space<vmem>>)
    %104 = arith.index_cast %arg0 : i32 to index
    %c5_49 = arith.constant 5 : index
    %105 = memref.load %arg1[%104, %c5_49] : memref<2x8xi32, #tpu.memory_space<smem>>
    %c5_i32_50 = arith.constant 5 : i32
    %c5_i32_51 = arith.constant 5 : i32
    %c0_i32_52 = arith.constant 0 : i32
    %106 = tpu.memref_slice %arg2[%105, %c0_i32_52] : memref<32x128xf32, #tpu.memory_space<any>> -> memref<1x128xf32, #tpu.memory_space<any>>
    %107 = tpu.memref_squeeze %106 : memref<1x128xf32, #tpu.memory_space<any>> -> memref<128xf32, #tpu.memory_space<any>>
    %c0_i32_53 = arith.constant 0 : i32
    %108 = tpu.memref_slice %arg10[%c5_i32_50, %c0_i32_53] : memref<8x128xf32, #tpu.memory_space<vmem>> -> memref<1x128xf32, #tpu.memory_space<vmem>>
    %109 = tpu.memref_squeeze %108 : memref<1x128xf32, #tpu.memory_space<vmem>> -> memref<128xf32, #tpu.memory_space<vmem>>
    %110 = tpu.memref_slice %arg13[%c5_i32_51] : memref<8x!tpu.dma_semaphore, #tpu.memory_space<semaphore_mem>> -> memref<1x!tpu.dma_semaphore, #tpu.memory_space<semaphore_mem>>
    %111 = tpu.memref_squeeze %110 : memref<1x!tpu.dma_semaphore, #tpu.memory_space<semaphore_mem>> -> memref<!tpu.dma_semaphore, #tpu.memory_space<semaphore_mem>>
    tpu.wait_dma2 semaphore(%111 : memref<!tpu.dma_semaphore, #tpu.memory_space<semaphore_mem>>) src(%107 : memref<128xf32, #tpu.memory_space<any>>) dst(%109 : memref<128xf32, #tpu.memory_space<vmem>>)
    %112 = arith.index_cast %arg0 : i32 to index
    %c6_54 = arith.constant 6 : index
    %113 = memref.load %arg1[%112, %c6_54] : memref<2x8xi32, #tpu.memory_space<smem>>
    %c6_i32_55 = arith.constant 6 : i32
    %c6_i32_56 = arith.constant 6 : i32
    %c0_i32_57 = arith.constant 0 : i32
    %114 = tpu.memref_slice %arg2[%113, %c0_i32_57] : memref<32x128xf32, #tpu.memory_space<any>> -> memref<1x128xf32, #tpu.memory_space<any>>
    %115 = tpu.memref_squeeze %114 : memref<1x128xf32, #tpu.memory_space<any>> -> memref<128xf32, #tpu.memory_space<any>>
    %c0_i32_58 = arith.constant 0 : i32
    %116 = tpu.memref_slice %arg10[%c6_i32_55, %c0_i32_58] : memref<8x128xf32, #tpu.memory_space<vmem>> -> memref<1x128xf32, #tpu.memory_space<vmem>>
    %117 = tpu.memref_squeeze %116 : memref<1x128xf32, #tpu.memory_space<vmem>> -> memref<128xf32, #tpu.memory_space<vmem>>
    %118 = tpu.memref_slice %arg13[%c6_i32_56] : memref<8x!tpu.dma_semaphore, #tpu.memory_space<semaphore_mem>> -> memref<1x!tpu.dma_semaphore, #tpu.memory_space<semaphore_mem>>
    %119 = tpu.memref_squeeze %118 : memref<1x!tpu.dma_semaphore, #tpu.memory_space<semaphore_mem>> -> memref<!tpu.dma_semaphore, #tpu.memory_space<semaphore_mem>>
    tpu.wait_dma2 semaphore(%119 : memref<!tpu.dma_semaphore, #tpu.memory_space<semaphore_mem>>) src(%115 : memref<128xf32, #tpu.memory_space<any>>) dst(%117 : memref<128xf32, #tpu.memory_space<vmem>>)
    %120 = arith.index_cast %arg0 : i32 to index
    %c7_59 = arith.constant 7 : index
    %121 = memref.load %arg1[%120, %c7_59] : memref<2x8xi32, #tpu.memory_space<smem>>
    %c7_i32_60 = arith.constant 7 : i32
    %c7_i32_61 = arith.constant 7 : i32
    %c0_i32_62 = arith.constant 0 : i32
    %122 = tpu.memref_slice %arg2[%121, %c0_i32_62] : memref<32x128xf32, #tpu.memory_space<any>> -> memref<1x128xf32, #tpu.memory_space<any>>
    %123 = tpu.memref_squeeze %122 : memref<1x128xf32, #tpu.memory_space<any>> -> memref<128xf32, #tpu.memory_space<any>>
    %c0_i32_63 = arith.constant 0 : i32
    %124 = tpu.memref_slice %arg10[%c7_i32_60, %c0_i32_63] : memref<8x128xf32, #tpu.memory_space<vmem>> -> memref<1x128xf32, #tpu.memory_space<vmem>>
    %125 = tpu.memref_squeeze %124 : memref<1x128xf32, #tpu.memory_space<vmem>> -> memref<128xf32, #tpu.memory_space<vmem>>
    %126 = tpu.memref_slice %arg13[%c7_i32_61] : memref<8x!tpu.dma_semaphore, #tpu.memory_space<semaphore_mem>> -> memref<1x!tpu.dma_semaphore, #tpu.memory_space<semaphore_mem>>
    %127 = tpu.memref_squeeze %126 : memref<1x!tpu.dma_semaphore, #tpu.memory_space<semaphore_mem>> -> memref<!tpu.dma_semaphore, #tpu.memory_space<semaphore_mem>>
    tpu.wait_dma2 semaphore(%127 : memref<!tpu.dma_semaphore, #tpu.memory_space<semaphore_mem>>) src(%123 : memref<128xf32, #tpu.memory_space<any>>) dst(%125 : memref<128xf32, #tpu.memory_space<vmem>>)
    %cst = arith.constant 0.000000e+00 : bf16
    %128 = vector.broadcast %cst : bf16 to vector<1x128xbf16>
    %cst_64 = arith.constant 0.000000e+00 : f32
    %129 = vector.broadcast %cst_64 : f32 to vector<1x128xf32>
    %c0_65 = arith.constant 0 : index
    %c0_66 = arith.constant 0 : index
    %130 = vector.load %arg11[%c0_65, %c0_66] : memref<8x128xbf16, #tpu.memory_space<vmem>>, vector<1x128xbf16>
    tpu.vector_store %arg11[%c0_65, %c0_66], %128 {strides = array<i32>} : memref<8x128xbf16, #tpu.memory_space<vmem>>, vector<1x128xbf16>,
    %c0_67 = arith.constant 0 : index
    %c0_68 = arith.constant 0 : index
    %131 = vector.load %arg4[%c0_67, %c0_68] : memref<1x128xf32, #tpu.memory_space<vmem>>, vector<1x128xf32>
    %c0_69 = arith.constant 0 : index
    %c0_70 = arith.constant 0 : index
    %132 = vector.load %arg6[%c0_69, %c0_70] : memref<1x128xf32, #tpu.memory_space<vmem>>, vector<1x128xf32>
    %c0_71 = arith.constant 0 : index
    %c0_72 = arith.constant 0 : index
    %133 = vector.load %arg10[%c0_71, %c0_72] : memref<8x128xf32, #tpu.memory_space<vmem>>, vector<8x128xf32>
    %134 = arith.truncf %133 : vector<8x128xf32> to vector<8x128xbf16>
    %c0_73 = arith.constant 0 : index
    %c0_74 = arith.constant 0 : index
    %135 = vector.load %arg3[%c0_73, %c0_74] : memref<128x384xbf16, #tpu.memory_space<vmem>>, vector<128x384xbf16>
    %cst_75 = arith.constant dense<0.000000e+00> : vector<8x384xf32>
    %136 = tpu.matmul %134, %135, %cst_75 {dimension_numbers = #tpu.dot_dimension_numbers<[1], [0], [0], [1], [0, 0, 1, 1], [], []>} : vector<8x128xbf16>, vector<128x384xbf16>, vector<8x384xf32> -> vector<8x384xf32>
    %137 = vector.extract_strided_slice %136 {offsets = [0, 0], sizes = [6, 128], strides = [1, 1]} : vector<8x384xf32> to vector<6x128xf32>
    %138 = vector.extract_strided_slice %136 {offsets = [1, 128], sizes = [6, 128], strides = [1, 1]} : vector<8x384xf32> to vector<6x128xf32>
    %139 = arith.addf %137, %138 : vector<6x128xf32>
    %140 = vector.extract_strided_slice %136 {offsets = [2, 256], sizes = [6, 128], strides = [1, 1]} : vector<8x384xf32> to vector<6x128xf32>
    %141 = arith.addf %139, %140 : vector<6x128xf32>
    %142 = vector.broadcast %131 : vector<1x128xf32> to vector<6x128xf32>
    %143 = arith.addf %141, %142 : vector<6x128xf32>
    %cst_76 = arith.constant 0.000000e+00 : f32
    %144 = vector.broadcast %cst_76 : f32 to vector<6x128xf32>
    %145 = arith.maximumf %143, %144 : vector<6x128xf32>
    %146 = arith.truncf %145 : vector<6x128xf32> to vector<6x128xbf16>
    %c1_77 = arith.constant 1 : index
    %c0_78 = arith.constant 0 : index
    %147 = vector.load %arg11[%c1_77, %c0_78] : memref<8x128xbf16, #tpu.memory_space<vmem>>, vector<6x128xbf16>
    tpu.vector_store %arg11[%c1_77, %c0_78], %146 {strides = array<i32>} : memref<8x128xbf16, #tpu.memory_space<vmem>>, vector<6x128xbf16>,
    %c7_79 = arith.constant 7 : index
    %c0_80 = arith.constant 0 : index
    %148 = vector.load %arg11[%c7_79, %c0_80] : memref<8x128xbf16, #tpu.memory_space<vmem>>, vector<1x128xbf16>
    tpu.vector_store %arg11[%c7_79, %c0_80], %128 {strides = array<i32>} : memref<8x128xbf16, #tpu.memory_space<vmem>>, vector<1x128xbf16>,
    %c0_81 = arith.constant 0 : index
    %c0_82 = arith.constant 0 : index
    %149 = vector.load %arg11[%c0_81, %c0_82] : memref<8x128xbf16, #tpu.memory_space<vmem>>, vector<8x128xbf16>
    %c0_83 = arith.constant 0 : index
    %c0_84 = arith.constant 0 : index
    %150 = vector.load %arg5[%c0_83, %c0_84] : memref<128x384xbf16, #tpu.memory_space<vmem>>, vector<128x384xbf16>
    %cst_85 = arith.constant dense<0.000000e+00> : vector<8x384xf32>
    %151 = tpu.matmul %149, %150, %cst_85 {dimension_numbers = #tpu.dot_dimension_numbers<[1], [0], [0], [1], [0, 0, 1, 1], [], []>} : vector<8x128xbf16>, vector<128x384xbf16>, vector<8x384xf32> -> vector<8x384xf32>
    %152 = vector.extract_strided_slice %151 {offsets = [0, 0], sizes = [6, 128], strides = [1, 1]} : vector<8x384xf32> to vector<6x128xf32>
    %153 = vector.extract_strided_slice %151 {offsets = [1, 128], sizes = [6, 128], strides = [1, 1]} : vector<8x384xf32> to vector<6x128xf32>
    %154 = arith.addf %152, %153 : vector<6x128xf32>
    %155 = vector.extract_strided_slice %151 {offsets = [2, 256], sizes = [6, 128], strides = [1, 1]} : vector<8x384xf32> to vector<6x128xf32>
    %156 = arith.addf %154, %155 : vector<6x128xf32>
    %157 = vector.broadcast %132 : vector<1x128xf32> to vector<6x128xf32>
    %158 = arith.addf %156, %157 : vector<6x128xf32>
    %cst_86 = arith.constant 0.000000e+00 : f32
    %159 = vector.broadcast %cst_86 : f32 to vector<6x128xf32>
    %160 = arith.maximumf %158, %159 : vector<6x128xf32>
    %161 = arith.truncf %160 : vector<6x128xf32> to vector<6x128xbf16>
    %c1_87 = arith.constant 1 : index
    %c0_88 = arith.constant 0 : index
    %162 = vector.load %arg11[%c1_87, %c0_88] : memref<8x128xbf16, #tpu.memory_space<vmem>>, vector<6x128xbf16>
    tpu.vector_store %arg11[%c1_87, %c0_88], %161 {strides = array<i32>} : memref<8x128xbf16, #tpu.memory_space<vmem>>, vector<6x128xbf16>,
    %c7_89 = arith.constant 7 : index
    %c0_90 = arith.constant 0 : index
    %163 = vector.load %arg11[%c7_89, %c0_90] : memref<8x128xbf16, #tpu.memory_space<vmem>>, vector<1x128xbf16>
    tpu.vector_store %arg11[%c7_89, %c0_90], %128 {strides = array<i32>} : memref<8x128xbf16, #tpu.memory_space<vmem>>, vector<1x128xbf16>,
    %c0_91 = arith.constant 0 : index
    %c0_92 = arith.constant 0 : index
    %164 = vector.load %arg11[%c0_91, %c0_92] : memref<8x128xbf16, #tpu.memory_space<vmem>>, vector<8x128xbf16>
    %c0_93 = arith.constant 0 : index
    %c0_94 = arith.constant 0 : index
    %165 = vector.load %arg5[%c0_93, %c0_94] : memref<128x384xbf16, #tpu.memory_space<vmem>>, vector<128x384xbf16>
    %cst_95 = arith.constant dense<0.000000e+00> : vector<8x384xf32>
    %166 = tpu.matmul %164, %165, %cst_95 {dimension_numbers = #tpu.dot_dimension_numbers<[1], [0], [0], [1], [0, 0, 1, 1], [], []>} : vector<8x128xbf16>, vector<128x384xbf16>, vector<8x384xf32> -> vector<8x384xf32>
    %167 = vector.extract_strided_slice %166 {offsets = [0, 0], sizes = [6, 128], strides = [1, 1]} : vector<8x384xf32> to vector<6x128xf32>
    %168 = vector.extract_strided_slice %166 {offsets = [1, 128], sizes = [6, 128], strides = [1, 1]} : vector<8x384xf32> to vector<6x128xf32>
    %169 = arith.addf %167, %168 : vector<6x128xf32>
    %170 = vector.extract_strided_slice %166 {offsets = [2, 256], sizes = [6, 128], strides = [1, 1]} : vector<8x384xf32> to vector<6x128xf32>
    %171 = arith.addf %169, %170 : vector<6x128xf32>
    %172 = vector.broadcast %132 : vector<1x128xf32> to vector<6x128xf32>
    %173 = arith.addf %171, %172 : vector<6x128xf32>
    %c0_96 = arith.constant 0 : index
    %c0_97 = arith.constant 0 : index
    %174 = vector.load %arg12[%c0_96, %c0_97] : memref<8x128xf32, #tpu.memory_space<vmem>>, vector<6x128xf32>
    tpu.vector_store %arg12[%c0_96, %c0_97], %173 {strides = array<i32>} : memref<8x128xf32, #tpu.memory_space<vmem>>, vector<6x128xf32>,
    %c6_98 = arith.constant 6 : index
    %c0_99 = arith.constant 0 : index
    %175 = vector.load %arg12[%c6_98, %c0_99] : memref<8x128xf32, #tpu.memory_space<vmem>>, vector<1x128xf32>
    tpu.vector_store %arg12[%c6_98, %c0_99], %129 {strides = array<i32>} : memref<8x128xf32, #tpu.memory_space<vmem>>, vector<1x128xf32>,
    %c0_100 = arith.constant 0 : index
    %c0_101 = arith.constant 0 : index
    %176 = tpu.strided_load %arg12[%c0_100, %c0_101] {strides = array<i32: 2, 1>} : memref<8x128xf32, #tpu.memory_space<vmem>>, vector<3x128xf32>
    %c1_102 = arith.constant 1 : index
    %c0_103 = arith.constant 0 : index
    %177 = tpu.strided_load %arg12[%c1_102, %c0_103] {strides = array<i32: 2, 1>} : memref<8x128xf32, #tpu.memory_space<vmem>>, vector<3x128xf32>
    %c2_104 = arith.constant 2 : index
    %c0_105 = arith.constant 0 : index
    %178 = tpu.strided_load %arg12[%c2_104, %c0_105] {strides = array<i32: 2, 1>} : memref<8x128xf32, #tpu.memory_space<vmem>>, vector<3x128xf32>
    %179 = arith.maximumf %176, %177 : vector<3x128xf32>
    %180 = arith.maximumf %179, %178 : vector<3x128xf32>
    %cst_106 = arith.constant 0.000000e+00 : f32
    %181 = vector.broadcast %cst_106 : f32 to vector<3x128xf32>
    %182 = arith.maximumf %180, %181 : vector<3x128xf32>
    %183 = arith.truncf %182 : vector<3x128xf32> to vector<3x128xbf16>
    %c1_107 = arith.constant 1 : index
    %c0_108 = arith.constant 0 : index
    %184 = vector.load %arg11[%c1_107, %c0_108] : memref<8x128xbf16, #tpu.memory_space<vmem>>, vector<3x128xbf16>
    tpu.vector_store %arg11[%c1_107, %c0_108], %183 {strides = array<i32>} : memref<8x128xbf16, #tpu.memory_space<vmem>>, vector<3x128xbf16>,
    %c4_109 = arith.constant 4 : index
    %c0_110 = arith.constant 0 : index
    %185 = vector.load %arg11[%c4_109, %c0_110] : memref<8x128xbf16, #tpu.memory_space<vmem>>, vector<1x128xbf16>
    tpu.vector_store %arg11[%c4_109, %c0_110], %128 {strides = array<i32>} : memref<8x128xbf16, #tpu.memory_space<vmem>>, vector<1x128xbf16>,
    %c0_111 = arith.constant 0 : index
    %c0_112 = arith.constant 0 : index
    %186 = vector.load %arg11[%c0_111, %c0_112] : memref<8x128xbf16, #tpu.memory_space<vmem>>, vector<5x128xbf16>
    %c0_113 = arith.constant 0 : index
    %c0_114 = arith.constant 0 : index
    %187 = vector.load %arg5[%c0_113, %c0_114] : memref<128x384xbf16, #tpu.memory_space<vmem>>, vector<128x384xbf16>
    %cst_115 = arith.constant dense<0.000000e+00> : vector<5x384xf32>
    %188 = tpu.matmul %186, %187, %cst_115 {dimension_numbers = #tpu.dot_dimension_numbers<[1], [0], [0], [1], [0, 0, 1, 1], [], []>} : vector<5x128xbf16>, vector<128x384xbf16>, vector<5x384xf32> -> vector<5x384xf32>
    %189 = vector.extract_strided_slice %188 {offsets = [0, 0], sizes = [3, 128], strides = [1, 1]} : vector<5x384xf32> to vector<3x128xf32>
    %190 = vector.extract_strided_slice %188 {offsets = [1, 128], sizes = [3, 128], strides = [1, 1]} : vector<5x384xf32> to vector<3x128xf32>
    %191 = arith.addf %189, %190 : vector<3x128xf32>
    %192 = vector.extract_strided_slice %188 {offsets = [2, 256], sizes = [3, 128], strides = [1, 1]} : vector<5x384xf32> to vector<3x128xf32>
    %193 = arith.addf %191, %192 : vector<3x128xf32>
    %194 = vector.broadcast %132 : vector<1x128xf32> to vector<3x128xf32>
    %195 = arith.addf %193, %194 : vector<3x128xf32>
    %cst_116 = arith.constant 0.000000e+00 : f32
    %196 = vector.broadcast %cst_116 : f32 to vector<3x128xf32>
    %197 = arith.maximumf %195, %196 : vector<3x128xf32>
    %198 = arith.truncf %197 : vector<3x128xf32> to vector<3x128xbf16>
    %c1_117 = arith.constant 1 : index
    %c0_118 = arith.constant 0 : index
    %199 = vector.load %arg11[%c1_117, %c0_118] : memref<8x128xbf16, #tpu.memory_space<vmem>>, vector<3x128xbf16>
    tpu.vector_store %arg11[%c1_117, %c0_118], %198 {strides = array<i32>} : memref<8x128xbf16, #tpu.memory_space<vmem>>, vector<3x128xbf16>,
    %c4_119 = arith.constant 4 : index
    %c0_120 = arith.constant 0 : index
    %200 = vector.load %arg11[%c4_119, %c0_120] : memref<8x128xbf16, #tpu.memory_space<vmem>>, vector<1x128xbf16>
    tpu.vector_store %arg11[%c4_119, %c0_120], %128 {strides = array<i32>} : memref<8x128xbf16, #tpu.memory_space<vmem>>, vector<1x128xbf16>,
    %c0_121 = arith.constant 0 : index
    %c0_122 = arith.constant 0 : index
    %201 = vector.load %arg11[%c0_121, %c0_122] : memref<8x128xbf16, #tpu.memory_space<vmem>>, vector<5x128xbf16>
    %c0_123 = arith.constant 0 : index
    %c0_124 = arith.constant 0 : index
    %202 = vector.load %arg5[%c0_123, %c0_124] : memref<128x384xbf16, #tpu.memory_space<vmem>>, vector<128x384xbf16>
    %cst_125 = arith.constant dense<0.000000e+00> : vector<5x384xf32>
    %203 = tpu.matmul %201, %202, %cst_125 {dimension_numbers = #tpu.dot_dimension_numbers<[1], [0], [0], [1], [0, 0, 1, 1], [], []>} : vector<5x128xbf16>, vector<128x384xbf16>, vector<5x384xf32> -> vector<5x384xf32>
    %204 = vector.extract_strided_slice %203 {offsets = [0, 0], sizes = [3, 128], strides = [1, 1]} : vector<5x384xf32> to vector<3x128xf32>
    %205 = vector.extract_strided_slice %203 {offsets = [1, 128], sizes = [3, 128], strides = [1, 1]} : vector<5x384xf32> to vector<3x128xf32>
    %206 = arith.addf %204, %205 : vector<3x128xf32>
    %207 = vector.extract_strided_slice %203 {offsets = [2, 256], sizes = [3, 128], strides = [1, 1]} : vector<5x384xf32> to vector<3x128xf32>
    %208 = arith.addf %206, %207 : vector<3x128xf32>
    %209 = vector.broadcast %132 : vector<1x128xf32> to vector<3x128xf32>
    %210 = arith.addf %208, %209 : vector<3x128xf32>
    %211 = arith.addf %210, %180 : vector<3x128xf32>
    %c0_126 = arith.constant 0 : index
    %c0_127 = arith.constant 0 : index
    %212 = vector.load %arg12[%c0_126, %c0_127] : memref<8x128xf32, #tpu.memory_space<vmem>>, vector<3x128xf32>
    tpu.vector_store %arg12[%c0_126, %c0_127], %211 {strides = array<i32>} : memref<8x128xf32, #tpu.memory_space<vmem>>, vector<3x128xf32>,
    %c0_128 = arith.constant 0 : index
    %c0_129 = arith.constant 0 : index
    %213 = vector.load %arg12[%c0_128, %c0_129] : memref<8x128xf32, #tpu.memory_space<vmem>>, vector<1x128xf32>
    %c1_130 = arith.constant 1 : index
    %c0_131 = arith.constant 0 : index
    %214 = vector.load %arg12[%c1_130, %c0_131] : memref<8x128xf32, #tpu.memory_space<vmem>>, vector<1x128xf32>
    %c2_132 = arith.constant 2 : index
    %c0_133 = arith.constant 0 : index
    %215 = vector.load %arg12[%c2_132, %c0_133] : memref<8x128xf32, #tpu.memory_space<vmem>>, vector<1x128xf32>
    %216 = arith.maximumf %213, %214 : vector<1x128xf32>
    %217 = arith.maximumf %216, %215 : vector<1x128xf32>
    %cst_134 = arith.constant 0.000000e+00 : f32
    %218 = vector.broadcast %cst_134 : f32 to vector<1x128xf32>
    %219 = arith.maximumf %217, %218 : vector<1x128xf32>
    %220 = arith.truncf %219 : vector<1x128xf32> to vector<1x128xbf16>
    %c1_135 = arith.constant 1 : index
    %c0_136 = arith.constant 0 : index
    %221 = vector.load %arg11[%c1_135, %c0_136] : memref<8x128xbf16, #tpu.memory_space<vmem>>, vector<1x128xbf16>
    tpu.vector_store %arg11[%c1_135, %c0_136], %220 {strides = array<i32>} : memref<8x128xbf16, #tpu.memory_space<vmem>>, vector<1x128xbf16>,
    %c2_137 = arith.constant 2 : index
    %c0_138 = arith.constant 0 : index
    %222 = vector.load %arg11[%c2_137, %c0_138] : memref<8x128xbf16, #tpu.memory_space<vmem>>, vector<1x128xbf16>
    tpu.vector_store %arg11[%c2_137, %c0_138], %128 {strides = array<i32>} : memref<8x128xbf16, #tpu.memory_space<vmem>>, vector<1x128xbf16>,
    %c0_139 = arith.constant 0 : index
    %c0_140 = arith.constant 0 : index
    %223 = vector.load %arg11[%c0_139, %c0_140] : memref<8x128xbf16, #tpu.memory_space<vmem>>, vector<3x128xbf16>
    %c0_141 = arith.constant 0 : index
    %c0_142 = arith.constant 0 : index
    %224 = vector.load %arg5[%c0_141, %c0_142] : memref<128x384xbf16, #tpu.memory_space<vmem>>, vector<128x384xbf16>
    %cst_143 = arith.constant dense<0.000000e+00> : vector<3x384xf32>
    %225 = tpu.matmul %223, %224, %cst_143 {dimension_numbers = #tpu.dot_dimension_numbers<[1], [0], [0], [1], [0, 0, 1, 1], [], []>} : vector<3x128xbf16>, vector<128x384xbf16>, vector<3x384xf32> -> vector<3x384xf32>
    %226 = vector.extract_strided_slice %225 {offsets = [0, 0], sizes = [1, 128], strides = [1, 1]} : vector<3x384xf32> to vector<1x128xf32>
    %227 = vector.extract_strided_slice %225 {offsets = [1, 128], sizes = [1, 128], strides = [1, 1]} : vector<3x384xf32> to vector<1x128xf32>
    %228 = arith.addf %226, %227 : vector<1x128xf32>
    %229 = vector.extract_strided_slice %225 {offsets = [2, 256], sizes = [1, 128], strides = [1, 1]} : vector<3x384xf32> to vector<1x128xf32>
    %230 = arith.addf %228, %229 : vector<1x128xf32>
    %231 = arith.addf %230, %132 : vector<1x128xf32>
    %cst_144 = arith.constant 0.000000e+00 : f32
    %232 = vector.broadcast %cst_144 : f32 to vector<1x128xf32>
    %233 = arith.maximumf %231, %232 : vector<1x128xf32>
    %234 = arith.truncf %233 : vector<1x128xf32> to vector<1x128xbf16>
    %c1_145 = arith.constant 1 : index
    %c0_146 = arith.constant 0 : index
    %235 = vector.load %arg11[%c1_145, %c0_146] : memref<8x128xbf16, #tpu.memory_space<vmem>>, vector<1x128xbf16>
    tpu.vector_store %arg11[%c1_145, %c0_146], %234 {strides = array<i32>} : memref<8x128xbf16, #tpu.memory_space<vmem>>, vector<1x128xbf16>,
    %c2_147 = arith.constant 2 : index
    %c0_148 = arith.constant 0 : index
    %236 = vector.load %arg11[%c2_147, %c0_148] : memref<8x128xbf16, #tpu.memory_space<vmem>>, vector<1x128xbf16>
    tpu.vector_store %arg11[%c2_147, %c0_148], %128 {strides = array<i32>} : memref<8x128xbf16, #tpu.memory_space<vmem>>, vector<1x128xbf16>,
    %c0_149 = arith.constant 0 : index
    %c0_150 = arith.constant 0 : index
    %237 = vector.load %arg11[%c0_149, %c0_150] : memref<8x128xbf16, #tpu.memory_space<vmem>>, vector<3x128xbf16>
    %c0_151 = arith.constant 0 : index
    %c0_152 = arith.constant 0 : index
    %238 = vector.load %arg5[%c0_151, %c0_152] : memref<128x384xbf16, #tpu.memory_space<vmem>>, vector<128x384xbf16>
    %cst_153 = arith.constant dense<0.000000e+00> : vector<3x384xf32>
    %239 = tpu.matmul %237, %238, %cst_153 {dimension_numbers = #tpu.dot_dimension_numbers<[1], [0], [0], [1], [0, 0, 1, 1], [], []>} : vector<3x128xbf16>, vector<128x384xbf16>, vector<3x384xf32> -> vector<3x384xf32>
    %240 = vector.extract_strided_slice %239 {offsets = [0, 0], sizes = [1, 128], strides = [1, 1]} : vector<3x384xf32> to vector<1x128xf32>
    %241 = vector.extract_strided_slice %239 {offsets = [1, 128], sizes = [1, 128], strides = [1, 1]} : vector<3x384xf32> to vector<1x128xf32>
    %242 = arith.addf %240, %241 : vector<1x128xf32>
    %243 = vector.extract_strided_slice %239 {offsets = [2, 256], sizes = [1, 128], strides = [1, 1]} : vector<3x384xf32> to vector<1x128xf32>
    %244 = arith.addf %242, %243 : vector<1x128xf32>
    %245 = arith.addf %244, %132 : vector<1x128xf32>
    %246 = arith.addf %245, %217 : vector<1x128xf32>
    %247 = tpu.concatenate %246, %246 in 1 : vector<1x128xf32>, vector<1x128xf32> -> vector<1x256xf32>
    %248 = arith.truncf %247 : vector<1x256xf32> to vector<1x256xbf16>
    %c0_154 = arith.constant 0 : index
    %c0_155 = arith.constant 0 : index
    %249 = vector.load %arg7[%c0_154, %c0_155] : memref<256x128xbf16, #tpu.memory_space<vmem>>, vector<256x128xbf16>
    %cst_156 = arith.constant dense<0.000000e+00> : vector<1x128xf32>
    %250 = tpu.matmul %248, %249, %cst_156 {dimension_numbers = #tpu.dot_dimension_numbers<[1], [0], [0], [1], [0, 0, 1, 1], [], []>} : vector<1x256xbf16>, vector<256x128xbf16>, vector<1x128xf32> -> vector<1x128xf32>
    %c0_157 = arith.constant 0 : index
    %c0_158 = arith.constant 0 : index
    %251 = vector.load %arg8[%c0_157, %c0_158] : memref<1x128xf32, #tpu.memory_space<vmem>>, vector<1x128xf32>
    %252 = arith.addf %250, %251 : vector<1x128xf32>
    %c0_159 = arith.constant 0 : index
    %c0_160 = arith.constant 0 : index
    %c0_161 = arith.constant 0 : index
    %253 = vector.load %arg9[%c0_159, %c0_160, %c0_161] : memref<1x1x128xf32, #tpu.memory_space<vmem>>, vector<1x1x128xf32>
    %254 = vector.shape_cast %253 : vector<1x1x128xf32> to vector<1x128xf32>
    %255 = vector.shape_cast %252 : vector<1x128xf32> to vector<1x1x128xf32>
    tpu.vector_store %arg9[%c0_159, %c0_160, %c0_161], %255 {strides = array<i32>} : memref<1x1x128xf32, #tpu.memory_space<vmem>>, vector<1x1x128xf32>,
    return
  }
  func.func @transform_1(%arg0: i32, %arg1: memref<2x8xi32, #tpu.memory_space<smem>>) -> (i32, i32) {
    %c0_i32 = arith.constant 0 : i32
    %c0_i32_0 = arith.constant 0 : i32
    %c0_i32_1 = arith.constant 0 : i32
    return %c0_i32, %c0_i32_0 : i32, i32
  }
  func.func @transform_2(%arg0: i32, %arg1: memref<2x8xi32, #tpu.memory_space<smem>>) -> (i32, i32) {
    %c0_i32 = arith.constant 0 : i32
    %c0_i32_0 = arith.constant 0 : i32
    %c0_i32_1 = arith.constant 0 : i32
    return %c0_i32, %c0_i32_0 : i32, i32
  }
  func.func @transform_3(%arg0: i32, %arg1: memref<2x8xi32, #tpu.memory_space<smem>>) -> (i32, i32) {
    %c0_i32 = arith.constant 0 : i32
    %c0_i32_0 = arith.constant 0 : i32
    %c0_i32_1 = arith.constant 0 : i32
    return %c0_i32, %c0_i32_0 : i32, i32
  }
  func.func @transform_4(%arg0: i32, %arg1: memref<2x8xi32, #tpu.memory_space<smem>>) -> (i32, i32) {
    %c0_i32 = arith.constant 0 : i32
    %c0_i32_0 = arith.constant 0 : i32
    %c0_i32_1 = arith.constant 0 : i32
    return %c0_i32, %c0_i32_0 : i32, i32
  }
  func.func @transform_5(%arg0: i32, %arg1: memref<2x8xi32, #tpu.memory_space<smem>>) -> (i32, i32) {
    %c0_i32 = arith.constant 0 : i32
    %c0_i32_0 = arith.constant 0 : i32
    %c0_i32_1 = arith.constant 0 : i32
    return %c0_i32, %c0_i32_0 : i32, i32
  }
  func.func @transform_6(%arg0: i32, %arg1: memref<2x8xi32, #tpu.memory_space<smem>>) -> (i32, i32) {
    %c0_i32 = arith.constant 0 : i32
    %c0_i32_0 = arith.constant 0 : i32
    %c0_i32_1 = arith.constant 0 : i32
    return %c0_i32, %c0_i32_0 : i32, i32
  }
  func.func @transform_7(%arg0: i32, %arg1: memref<2x8xi32, #tpu.memory_space<smem>>) -> (i32, i32, i32) {
    %c0_i32 = arith.constant 0 : i32
    %c0_i32_0 = arith.constant 0 : i32
    %c0_i32_1 = arith.constant 0 : i32
    return %arg0, %c0_i32, %c0_i32_0 : i32, i32, i32
  }
}

</mosaic_0001>

<llo_original>
// kernel: tpu_custom_call.1
$region0: #{tpu_custom_call.1}
  #allocation0 [shape = 'u32[]', space=smem, size = 0x4, offset = 0x4, fixed_abs, tag = 'smem constant byte address 0x4 - core index']
  #allocation1 [shape = 'u32[72,128]{1,0:T(1,128)}', space=vmem, size = 0x9000, scoped, tag = 'internal scratch']
  #allocation2 [shape = 'f32[8,128]{1,0:T(8,128)}', space=vmem, size = 0x1000, scoped, tag = 'scratch operand']
  #allocation3 [shape = 'bf16[8,128]{1,0:T(8,128)(2,1)}', space=vmem, size = 0x800, scoped, tag = 'scratch operand']
  #allocation4 [shape = 'f32[8,128]{1,0:T(8,128)}', space=vmem, size = 0x1000, scoped, tag = 'scratch operand']
  #allocation5 [shape = 's32[8]{0}', space=sflag, size = 0x20, scoped, tag = 'scratch operand']
  #allocation6 [shape = 's32[1]{0}', space=sflag, size = 0x4, scoped, tag = 'scoped memory for tpu_custom_call.1']
  #allocation7 [shape = 'u8[1024]{0}', space=smem, size = 0x400, scoped, tag = 'prefetched SMEM operand 0']
  #allocation15 [shape = 's32[]', space=sflag, size = 0x4, offset = 0, fixed_abs, tag = 'sflag constant byte address 0x0 - dummy sync flag']
  #allocation16 [shape = 's32[]', space=sflag, size = 0x4, offset = 0, fixed_abs, tag = 'sflag constant byte address 0x0 - dummy sync flag']
  #allocation17 [shape = 'u32[]', space=smem, size = 0x4, offset = 0x44, fixed_abs, tag = 'smem constant byte address 0x44 - assertion arg 0']
  #allocation18 [shape = 'u32[]', space=smem, size = 0x4, offset = 0x48, fixed_abs, tag = 'smem constant byte address 0x48 - assertion arg 1']
  #allocation19 [shape = 's32[]', space=sflag, size = 0x4, offset = 0, fixed_abs, tag = 'sflag constant byte address 0x0 - dummy sync flag']
  #allocation20 [shape = 's32[]', space=sflag, size = 0x4, offset = 0, fixed_abs, tag = 'sflag constant byte address 0x0 - dummy sync flag']
  #allocation21 [shape = 's32[]', space=sflag, size = 0x4, offset = 0, fixed_abs, tag = 'sflag constant byte address 0x0 - dummy sync flag']
  #allocation22 [shape = 's32[]', space=sflag, size = 0x4, offset = 0, fixed_abs, tag = 'sflag constant byte address 0x0 - dummy sync flag']
  #allocation23 [shape = 's32[]', space=sflag, size = 0x4, offset = 0, fixed_abs, tag = 'sflag constant byte address 0x0 - dummy sync flag']
  #allocation24 [shape = 's32[]', space=sflag, size = 0x4, offset = 0, fixed_abs, tag = 'sflag constant byte address 0x0 - dummy sync flag']
  #allocation25 [shape = 's32[]', space=sflag, size = 0x4, offset = 0, fixed_abs, tag = 'sflag constant byte address 0x0 - dummy sync flag']
  #allocation26 [shape = 's32[]', space=sflag, size = 0x4, offset = 0, fixed_abs, tag = 'sflag constant byte address 0x0 - dummy sync flag']
  #allocation27 [shape = 's32[]', space=sflag, size = 0x4, offset = 0, fixed_abs, tag = 'sflag constant byte address 0x0 - dummy sync flag']
  #allocation28 [shape = 's32[]', space=sflag, size = 0x4, offset = 0, fixed_abs, tag = 'sflag constant byte address 0x0 - dummy sync flag']
  #allocation29 [shape = 's32[]', space=sflag, size = 0x4, offset = 0, fixed_abs, tag = 'sflag constant byte address 0x0 - dummy sync flag']
  #allocation30 [shape = 's32[]', space=sflag, size = 0x4, offset = 0, fixed_abs, tag = 'sflag constant byte address 0x0 - dummy sync flag']
  #allocation31 [shape = 's32[]', space=sflag, size = 0x4, offset = 0, fixed_abs, tag = 'sflag constant byte address 0x0 - dummy sync flag']
  #allocation32 [shape = 's32[]', space=sflag, size = 0x4, offset = 0, fixed_abs, tag = 'sflag constant byte address 0x0 - dummy sync flag']
  %s0 = inlined_call_operand.hbm [shape: s32[2,8], index: 0, kind: input, shape index: {}]
  %s1 = inlined_call_operand.hbm [shape: f32[32,128], index: 1, kind: input, shape index: {}]
  %s2 = inlined_call_operand.hbm [shape: bf16[128,384], index: 2, kind: input, shape index: {}]
  %s3 = inlined_call_operand.vmem [shape: f32[1,128], index: 3, kind: input, shape index: {}]
  %s4 = inlined_call_operand.hbm [shape: bf16[128,384], index: 4, kind: input, shape index: {}]
  %s5 = inlined_call_operand.vmem [shape: f32[1,128], index: 5, kind: input, shape index: {}]
  %s6 = inlined_call_operand.hbm [shape: bf16[256,128], index: 6, kind: input, shape index: {}]
  %s7 = inlined_call_operand.vmem [shape: f32[1,128], index: 7, kind: input, shape index: {}]
  %s8 = inlined_call_operand.hbm [shape: f32[2,1,128], index: 8, kind: output, shape index: {}]
  %s9 = sld [smem:[#allocation0]]
  $region101: #{tpu_custom_call.1} parent=0
    _
  %s11 = ssub.s32 1, %s9
  %s12 = scalar_select 0, %s11, %s9
  %s14 = sshll.u32 %s0, 4
  %s15 = int_to_ptr.hbm [resolvable:$true] %s14
  %17 = dma.hbm_to_smem %s15, 32, [#allocation7], [#allocation6]
  %19 = dma.done [#allocation6], 32
  %20 = sfence
  $region1: #{tpu_custom_call.1} parent=0
    #allocation8 [shape = 'u8[98304]{0}', space=vmem, size = 0x18000, scoped, tag = 'input window, operand 2, single buffered']
    #allocation9 [shape = 's32[2]{0}', space=sflag, size = 0x8, scoped, tag = 'scoped memory for tpu_custom_call.1']
    #allocation10 [shape = 's32[2]{0}', space=sflag, size = 0x8, scoped, tag = 'scoped memory for tpu_custom_call.1']
    #allocation11 [shape = 'u8[98304]{0}', space=vmem, size = 0x18000, scoped, tag = 'input window, operand 4, single buffered']
    #allocation12 [shape = 's32[1]{0}', space=sflag, size = 0x4, scoped, tag = 'scoped memory for tpu_custom_call.1']
    #allocation13 [shape = 'u8[65536]{0}', space=vmem, size = 0x10000, scoped, tag = 'input window, operand 6, single buffered']
    #allocation14 [shape = 'u8[1024]{0}', space=vmem, size = 0x400, scoped, tag = 'output window, operand 0']
    %21 = vsyncpa [#allocation9], 0
    %22 = vsyncpa [#allocation12], 0
    %23 = vsyncpa [#allocation10], 0
    %s24 = scalar_lea.sflag [#allocation10], 1
    %25 = vsyncpa %s24, 0
    loop: start=0, step=1, limit=4
    $region2: #{tpu_custom_call.1} parent=1 // loop_pre_header
      _
    $region3: #{tpu_custom_call.1} parent=1 // loop_header
      %s27 = sphi 0, %s31
      %p28 = scmp.ge.s32.totalorder %s27, 4
      %s35 = sphi 0, %s35
      %s37 = sphi 0, %s35
      %s38 = sphi 0, %s37
      %s52 = sphi 0, %s38
      %s56 = sphi 0, %s56
      %s58 = sphi 0, %s56
      %s59 = sphi 0, %s58
      %s73 = sphi 0, %s59
      %s77 = sphi 0, %s77
      %s79 = sphi 0, %s77
      %s80 = sphi 0, %s79
      %s94 = sphi 0, %s80
      %s98 = sphi 0, %s98
      %s100 = sphi 0, %s98
      %s101 = sphi 0, %s100
      %s115 = sphi 0, %s101
      %s119 = sphi 0, %s119
      %s121 = sphi 0, %s119
      %s122 = sphi 0, %s121
      %s136 = sphi 0, %s122
      %s140 = sphi 0, %s140
      %s142 = sphi 0, %s140
      %s143 = sphi 0, %s142
      %s157 = sphi 0, %s143
      %s163 = sphi 0, %s165
      %s166 = sphi 0, %s163
      %s167 = sphi 0, %s166
      %s183 = sphi 0, %s167
    $region4: #{tpu_custom_call.1} parent=1 // loop_header_branch
      %30 = sbr.rel (%p28) target = $region8
    $region5: #{tpu_custom_call.1} parent=1 // loop_body
      %s32 = ssub.s32 %s27, 1
      %s33 = ssub.s32 %s27, 2
      %s34 = sadd.s32 %s27, 1
      %s36 = sadd.s32 %s35, 1
      %p39 = scmp.eq.s32.totalorder %s27, 1
      %p40 = scmp.ne.s32.totalorder %s35, %s37
      %p41 = scmp.eq.s32.totalorder %s27, 0
      %p42 = por %p40, %p41
      %p43 = scmp.ne.s32.totalorder %s35, %s37
      %p44 = scmp.eq.s32.totalorder %s32, 1
      %p45 = por %p43, %p44
      %p46 = scmp.ne.s32.totalorder %s37, %s38
      %p47 = scmp.eq.s32.totalorder %s32, 0
      %p48 = por %p46, %p47
      %p49 = scmp.ne.s32.totalorder %s37, %s38
      %p50 = scmp.eq.s32.totalorder %s33, 1
      %p51 = por %p49, %p50
      %p53 = scmp.ne.s32.totalorder %s38, %s52
      %p54 = scmp.eq.s32.totalorder %s33, 0
      %p55 = por %p53, %p54
      %s57 = sadd.s32 %s56, 1
      %p60 = scmp.eq.s32.totalorder %s27, 1
      %p61 = scmp.ne.s32.totalorder %s56, %s58
      %p62 = scmp.eq.s32.totalorder %s27, 0
      %p63 = por %p61, %p62
      %p64 = scmp.ne.s32.totalorder %s56, %s58
      %p65 = scmp.eq.s32.totalorder %s32, 1
      %p66 = por %p64, %p65
      %p67 = scmp.ne.s32.totalorder %s58, %s59
      %p68 = scmp.eq.s32.totalorder %s32, 0
      %p69 = por %p67, %p68
      %p70 = scmp.ne.s32.totalorder %s58, %s59
      %p71 = scmp.eq.s32.totalorder %s33, 1
      %p72 = por %p70, %p71
      %p74 = scmp.ne.s32.totalorder %s59, %s73
      %p75 = scmp.eq.s32.totalorder %s33, 0
      %p76 = por %p74, %p75
      %s78 = sadd.s32 %s77, 1
      %p81 = scmp.eq.s32.totalorder %s27, 1
      %p82 = scmp.ne.s32.totalorder %s77, %s79
      %p83 = scmp.eq.s32.totalorder %s27, 0
      %p84 = por %p82, %p83
      %p85 = scmp.ne.s32.totalorder %s77, %s79
      %p86 = scmp.eq.s32.totalorder %s32, 1
      %p87 = por %p85, %p86
      %p88 = scmp.ne.s32.totalorder %s79, %s80
      %p89 = scmp.eq.s32.totalorder %s32, 0
      %p90 = por %p88, %p89
      %p91 = scmp.ne.s32.totalorder %s79, %s80
      %p92 = scmp.eq.s32.totalorder %s33, 1
      %p93 = por %p91, %p92
      %p95 = scmp.ne.s32.totalorder %s80, %s94
      %p96 = scmp.eq.s32.totalorder %s33, 0
      %p97 = por %p95, %p96
      %s99 = sadd.s32 %s98, 1
      %p102 = scmp.eq.s32.totalorder %s27, 1
      %p103 = scmp.ne.s32.totalorder %s98, %s100
      %p104 = scmp.eq.s32.totalorder %s27, 0
      %p105 = por %p103, %p104
      %p106 = scmp.ne.s32.totalorder %s98, %s100
      %p107 = scmp.eq.s32.totalorder %s32, 1
      %p108 = por %p106, %p107
      %p109 = scmp.ne.s32.totalorder %s100, %s101
      %p110 = scmp.eq.s32.totalorder %s32, 0
      %p111 = por %p109, %p110
      %p112 = scmp.ne.s32.totalorder %s100, %s101
      %p113 = scmp.eq.s32.totalorder %s33, 1
      %p114 = por %p112, %p113
      %p116 = scmp.ne.s32.totalorder %s101, %s115
      %p117 = scmp.eq.s32.totalorder %s33, 0
      %p118 = por %p116, %p117
      %s120 = sadd.s32 %s119, 1
      %p123 = scmp.eq.s32.totalorder %s27, 1
      %p124 = scmp.ne.s32.totalorder %s119, %s121
      %p125 = scmp.eq.s32.totalorder %s27, 0
      %p126 = por %p124, %p125
      %p127 = scmp.ne.s32.totalorder %s119, %s121
      %p128 = scmp.eq.s32.totalorder %s32, 1
      %p129 = por %p127, %p128
      %p130 = scmp.ne.s32.totalorder %s121, %s122
      %p131 = scmp.eq.s32.totalorder %s32, 0
      %p132 = por %p130, %p131
      %p133 = scmp.ne.s32.totalorder %s121, %s122
      %p134 = scmp.eq.s32.totalorder %s33, 1
      %p135 = por %p133, %p134
      %p137 = scmp.ne.s32.totalorder %s122, %s136
      %p138 = scmp.eq.s32.totalorder %s33, 0
      %p139 = por %p137, %p138
      %s141 = sadd.s32 %s140, 1
      %p144 = scmp.eq.s32.totalorder %s27, 1
      %p145 = scmp.ne.s32.totalorder %s140, %s142
      %p146 = scmp.eq.s32.totalorder %s27, 0
      %p147 = por %p145, %p146
      %p148 = scmp.ne.s32.totalorder %s140, %s142
      %p149 = scmp.eq.s32.totalorder %s32, 1
      %p150 = por %p148, %p149
      %p151 = scmp.ne.s32.totalorder %s142, %s143
      %p152 = scmp.eq.s32.totalorder %s32, 0
      %p153 = por %p151, %p152
      %p154 = scmp.ne.s32.totalorder %s142, %s143
      %p155 = scmp.eq.s32.totalorder %s33, 1
      %p156 = por %p154, %p155
      %p158 = scmp.ne.s32.totalorder %s143, %s157
      %p159 = scmp.eq.s32.totalorder %s33, 0
      %p160 = por %p158, %p159
      %s161 = ssub.s32 %s27, %s34
      %p162 = scmp.eq.s32.totalorder %s161, 0
      %s164 = sadd.s32 %s163, 1
      %s165 = scalar_select %p162, %s163, %s164
      %p168 = pneg %p162
      %p169 = scmp.eq.s32.totalorder %s27, 1
      %p170 = por %p168, %p169
      %p171 = scmp.ne.s32.totalorder %s163, %s166
      %p172 = scmp.eq.s32.totalorder %s27, 0
      %p173 = por %p171, %p172
      %p174 = scmp.ne.s32.totalorder %s163, %s166
      %p175 = scmp.eq.s32.totalorder %s32, 1
      %p176 = por %p174, %p175
      %p177 = scmp.ne.s32.totalorder %s166, %s167
      %p178 = scmp.eq.s32.totalorder %s32, 0
      %p179 = por %p177, %p178
      %p180 = scmp.ne.s32.totalorder %s166, %s167
      %p181 = scmp.eq.s32.totalorder %s33, 1
      %p182 = por %p180, %p181
      %p184 = scmp.ne.s32.totalorder %s167, %s183
      %p185 = scmp.eq.s32.totalorder %s33, 0
      %p186 = por %p184, %p185
      %p187 = scmp.le.s32.totalorder 1, %s27
      %p188 = scmp.lt.s32.totalorder %s27, 3
      %p189 = pnand %p187, %p188
      %p190 = pneg %p189
      // Predicated region
      $region9: #{tpu_custom_call.1} parent=5 // pred_check
        _
      $region10: #{tpu_custom_call.1} parent=5 // pred_check_branch
        %192 = sbr.rel (%p189) target = $region12
      $region11: #{tpu_custom_call.1} parent=5 // pred_region
        %s193 = ssub.s32 %s27, 1
        // Predicated region
        $region13: #{tpu_custom_call.1} parent=11 // pred_check
          %p194 = pneg %p48
        $region14: #{tpu_custom_call.1} parent=11 // pred_check_branch
          %196 = sbr.rel (%p194) target = $region16
        $region15: #{tpu_custom_call.1} parent=11 // pred_region
          %198 = vsyncadd [#allocation9], 0
          %s199 = sshll.u32 %s2, 4
          %s200 = int_to_ptr.hbm [resolvable:$true] %s199
          %s201 = sshll.u32 [#allocation8], 4
          %s202 = int_to_ptr.vmem [resolvable:$true] %s201
          %207 = dma.hbm_to_vmem [thread:$0]  %s200, 3072, %s202, [#allocation9], 192, 192, 12
        $region16: #{tpu_custom_call.1} parent=11 // pred_fallthru
          _
        // Predicated region
        $region17: #{tpu_custom_call.1} parent=11 // pred_check
          %p208 = pneg %p69
        $region18: #{tpu_custom_call.1} parent=11 // pred_check_branch
          %210 = sbr.rel (%p208) target = $region20
        $region19: #{tpu_custom_call.1} parent=11 // pred_region
          _
        $region20: #{tpu_custom_call.1} parent=11 // pred_fallthru
          _
        // Predicated region
        $region21: #{tpu_custom_call.1} parent=11 // pred_check
          %p211 = pneg %p90
        $region22: #{tpu_custom_call.1} parent=11 // pred_check_branch
          %213 = sbr.rel (%p211) target = $region24
        $region23: #{tpu_custom_call.1} parent=11 // pred_region
          %215 = vsyncadd [#allocation12], 0
          %s216 = sshll.u32 %s4, 4
          %s217 = int_to_ptr.hbm [resolvable:$true] %s216
          %s218 = sshll.u32 [#allocation11], 4
          %s219 = int_to_ptr.vmem [resolvable:$true] %s218
          %224 = dma.hbm_to_vmem [thread:$0]  %s217, 3072, %s219, [#allocation12], 192, 192, 12
        $region24: #{tpu_custom_call.1} parent=11 // pred_fallthru
          _
        // Predicated region
        $region25: #{tpu_custom_call.1} parent=11 // pred_check
          %p225 = pneg %p111
        $region26: #{tpu_custom_call.1} parent=11 // pred_check_branch
          %227 = sbr.rel (%p225) target = $region28
        $region27: #{tpu_custom_call.1} parent=11 // pred_region
          _
        $region28: #{tpu_custom_call.1} parent=11 // pred_fallthru
          _
        // Predicated region
        $region29: #{tpu_custom_call.1} parent=11 // pred_check
          %p228 = pneg %p132
        $region30: #{tpu_custom_call.1} parent=11 // pred_check_branch
          %230 = sbr.rel (%p228) target = $region32
        $region31: #{tpu_custom_call.1} parent=11 // pred_region
          %232 = vsyncadd [#allocation12], 0
          %s233 = sshll.u32 %s6, 4
          %s234 = int_to_ptr.hbm [resolvable:$true] %s233
          %s235 = sshll.u32 [#allocation13], 4
          %s236 = int_to_ptr.vmem [resolvable:$true] %s235
          %241 = dma.hbm_to_vmem [thread:$0]  %s234, 2048, %s236, [#allocation12], 64, 64, 4
        $region32: #{tpu_custom_call.1} parent=11 // pred_fallthru
          _
        // Predicated region
        $region33: #{tpu_custom_call.1} parent=11 // pred_check
          %p242 = pneg %p153
        $region34: #{tpu_custom_call.1} parent=11 // pred_check_branch
          %244 = sbr.rel (%p242) target = $region36
        $region35: #{tpu_custom_call.1} parent=11 // pred_region
          _
        $region36: #{tpu_custom_call.1} parent=11 // pred_fallthru
          _
      $region12: #{tpu_custom_call.1} parent=5 // pred_fallthru
        _
      %p245 = scmp.lt.s32.totalorder %s27, 2
      // Predicated region
      $region37: #{tpu_custom_call.1} parent=5 // pred_check
        %p246 = pneg %p245
      $region38: #{tpu_custom_call.1} parent=5 // pred_check_branch
        %248 = sbr.rel (%p246) target = $region40
      $region39: #{tpu_custom_call.1} parent=5 // pred_region
        _
      $region40: #{tpu_custom_call.1} parent=5 // pred_fallthru
        _
      %p249 = scmp.le.s32.totalorder 1, %s27
      %p250 = scmp.lt.s32.totalorder %s27, 3
      %p251 = pnand %p249, %p250
      %p252 = pneg %p251
      // Predicated region
      $region41: #{tpu_custom_call.1} parent=5 // pred_check
        _
      $region42: #{tpu_custom_call.1} parent=5 // pred_check_branch
        %254 = sbr.rel (%p251) target = $region44
      $region43: #{tpu_custom_call.1} parent=5 // pred_region
        %s255 = ssub.s32 %s27, 1
        // Predicated region
        $region45: #{tpu_custom_call.1} parent=43 // pred_check
          %p256 = pneg %p48
        $region46: #{tpu_custom_call.1} parent=43 // pred_check_branch
          %258 = sbr.rel (%p256) target = $region48
        $region47: #{tpu_custom_call.1} parent=43 // pred_region
          %260 = dma.done [#allocation9], 3072
        $region48: #{tpu_custom_call.1} parent=43 // pred_fallthru
          _
        // Predicated region
        $region49: #{tpu_custom_call.1} parent=43 // pred_check
          %p261 = pneg %p90
        $region50: #{tpu_custom_call.1} parent=43 // pred_check_branch
          %263 = sbr.rel (%p261) target = $region52
        $region51: #{tpu_custom_call.1} parent=43 // pred_region
          %265 = dma.done [#allocation12], 3072
        $region52: #{tpu_custom_call.1} parent=43 // pred_fallthru
          _
        // Predicated region
        $region53: #{tpu_custom_call.1} parent=43 // pred_check
          %p266 = pneg %p132
        $region54: #{tpu_custom_call.1} parent=43 // pred_check_branch
          %268 = sbr.rel (%p266) target = $region56
        $region55: #{tpu_custom_call.1} parent=43 // pred_region
          %270 = dma.done [#allocation12], 2048
        $region56: #{tpu_custom_call.1} parent=43 // pred_fallthru
          _
        %p271 = pneg %p48
        %p272 = pneg %p45
        %p273 = pneg %p69
        %p274 = pneg %p66
        %p275 = pneg %p90
        %p276 = pneg %p87
        %p277 = pneg %p111
        %p278 = pneg %p108
        %p279 = pneg %p132
        %p280 = pneg %p129
        %p281 = pneg %p153
        %p282 = pneg %p150
        %p283 = pneg %p179
        %p284 = pneg %p176
        %s285 = sand.u32 %s166, 1
        %s286 = scalar_lea.sflag [#allocation10], %s285
        %s287 = sand.u32 %s166, 1
        %s288 = scalar_lea.vmem [#allocation14], %s287
        %s290 = smul.u32 %s32, 128
        %s291 = sld [smem:[#allocation7 + %s290]]
        %s292 = scalar_lea.hbm %s1, %s291
        // Predicated region
        $region57: #{tpu_custom_call.1} parent=43 // pred_check
          _
        $region58: #{tpu_custom_call.1} parent=43 // pred_check_branch
          %294 = sbr.rel target = $region60
        $region59: #{tpu_custom_call.1} parent=43 // pred_region
          %295 = sst [smem:[#allocation17]] [#allocation16]
          %296 = sst [smem:[#allocation18]] [#allocation15]
        $region60: #{tpu_custom_call.1} parent=43 // pred_fallthru
          _
        %298 = shalt.err (0)
        %s300 = sshll.u32 %s292, 4
        %s301 = int_to_ptr.hbm [resolvable:$true] %s300
        %s302 = sshll.u32 [#allocation2], 4
        %s303 = int_to_ptr.vmem [resolvable:$true] %s302
        %305 = dma.hbm_to_vmem [thread:$0]  %s301, 16, %s303, [#allocation5]
        %s306 = sadd.s32 %s290, 1
        %s307 = sld [smem:[#allocation7 + %s306]]
        %s308 = scalar_lea.hbm %s1, %s307
        %s309 = scalar_lea.vmem [#allocation2], 1
        %s310 = scalar_lea.sflag [#allocation5], 1
        // Predicated region
        $region61: #{tpu_custom_call.1} parent=43 // pred_check
          _
        $region62: #{tpu_custom_call.1} parent=43 // pred_check_branch
          %312 = sbr.rel target = $region64
        $region63: #{tpu_custom_call.1} parent=43 // pred_region
          %313 = sst [smem:[#allocation17]] [#allocation20]
          %314 = sst [smem:[#allocation18]] [#allocation19]
        $region64: #{tpu_custom_call.1} parent=43 // pred_fallthru
          _
        %316 = shalt.err (0)
        %s318 = sshll.u32 %s308, 4
        %s319 = int_to_ptr.hbm [resolvable:$true] %s318
        %s320 = sshll.u32 %s309, 4
        %s321 = int_to_ptr.vmem [resolvable:$true] %s320
        %323 = dma.hbm_to_vmem [thread:$0]  %s319, 16, %s321, %s310
        %s324 = sadd.s32 %s290, 2
        %s325 = sld [smem:[#allocation7 + %s324]]
        %s326 = scalar_lea.hbm %s1, %s325
        %s327 = scalar_lea.vmem [#allocation2], 2
        %s328 = scalar_lea.sflag [#allocation5], 2
        // Predicated region
        $region65: #{tpu_custom_call.1} parent=43 // pred_check
          _
        $region66: #{tpu_custom_call.1} parent=43 // pred_check_branch
          %330 = sbr.rel target = $region68
        $region67: #{tpu_custom_call.1} parent=43 // pred_region
          %331 = sst [smem:[#allocation17]] [#allocation22]
          %332 = sst [smem:[#allocation18]] [#allocation21]
        $region68: #{tpu_custom_call.1} parent=43 // pred_fallthru
          _
        %334 = shalt.err (0)
        %s336 = sshll.u32 %s326, 4
        %s337 = int_to_ptr.hbm [resolvable:$true] %s336
        %s338 = sshll.u32 %s327, 4
        %s339 = int_to_ptr.vmem [resolvable:$true] %s338
        %341 = dma.hbm_to_vmem [thread:$0]  %s337, 16, %s339, %s328
        %s342 = sadd.s32 %s290, 3
        %s343 = sld [smem:[#allocation7 + %s342]]
        %s344 = scalar_lea.hbm %s1, %s343
        %s345 = scalar_lea.vmem [#allocation2], 3
        %s346 = scalar_lea.sflag [#allocation5], 3
        // Predicated region
        $region69: #{tpu_custom_call.1} parent=43 // pred_check
          _
        $region70: #{tpu_custom_call.1} parent=43 // pred_check_branch
          %348 = sbr.rel target = $region72
        $region71: #{tpu_custom_call.1} parent=43 // pred_region
          %349 = sst [smem:[#allocation17]] [#allocation24]
          %350 = sst [smem:[#allocation18]] [#allocation23]
        $region72: #{tpu_custom_call.1} parent=43 // pred_fallthru
          _
        %352 = shalt.err (0)
        %s354 = sshll.u32 %s344, 4
        %s355 = int_to_ptr.hbm [resolvable:$true] %s354
        %s356 = sshll.u32 %s345, 4
        %s357 = int_to_ptr.vmem [resolvable:$true] %s356
        %359 = dma.hbm_to_vmem [thread:$0]  %s355, 16, %s357, %s346
        %s360 = sadd.s32 %s290, 4
        %s361 = sld [smem:[#allocation7 + %s360]]
        %s362 = scalar_lea.hbm %s1, %s361
        %s363 = scalar_lea.vmem [#allocation2], 4
        %s364 = scalar_lea.sflag [#allocation5], 4
        // Predicated region
        $region73: #{tpu_custom_call.1} parent=43 // pred_check
          _
        $region74: #{tpu_custom_call.1} parent=43 // pred_check_branch
          %366 = sbr.rel target = $region76
        $region75: #{tpu_custom_call.1} parent=43 // pred_region
          %367 = sst [smem:[#allocation17]] [#allocation26]
          %368 = sst [smem:[#allocation18]] [#allocation25]
        $region76: #{tpu_custom_call.1} parent=43 // pred_fallthru
          _
        %370 = shalt.err (0)
        %s372 = sshll.u32 %s362, 4
        %s373 = int_to_ptr.hbm [resolvable:$true] %s372
        %s374 = sshll.u32 %s363, 4
        %s375 = int_to_ptr.vmem [resolvable:$true] %s374
        %377 = dma.hbm_to_vmem [thread:$0]  %s373, 16, %s375, %s364
        %s378 = sadd.s32 %s290, 5
        %s379 = sld [smem:[#allocation7 + %s378]]
        %s380 = scalar_lea.hbm %s1, %s379
        %s381 = scalar_lea.vmem [#allocation2], 5
        %s382 = scalar_lea.sflag [#allocation5], 5
        // Predicated region
        $region77: #{tpu_custom_call.1} parent=43 // pred_check
          _
        $region78: #{tpu_custom_call.1} parent=43 // pred_check_branch
          %384 = sbr.rel target = $region80
        $region79: #{tpu_custom_call.1} parent=43 // pred_region
          %385 = sst [smem:[#allocation17]] [#allocation28]
          %386 = sst [smem:[#allocation18]] [#allocation27]
        $region80: #{tpu_custom_call.1} parent=43 // pred_fallthru
          _
        %388 = shalt.err (0)
        %s390 = sshll.u32 %s380, 4
        %s391 = int_to_ptr.hbm [resolvable:$true] %s390
        %s392 = sshll.u32 %s381, 4
        %s393 = int_to_ptr.vmem [resolvable:$true] %s392
        %395 = dma.hbm_to_vmem [thread:$0]  %s391, 16, %s393, %s382
        %s396 = sadd.s32 %s290, 6
        %s397 = sld [smem:[#allocation7 + %s396]]
        %s398 = scalar_lea.hbm %s1, %s397
        %s399 = scalar_lea.vmem [#allocation2], 6
        %s400 = scalar_lea.sflag [#allocation5], 6
        // Predicated region
        $region81: #{tpu_custom_call.1} parent=43 // pred_check
          _
        $region82: #{tpu_custom_call.1} parent=43 // pred_check_branch
          %402 = sbr.rel target = $region84
        $region83: #{tpu_custom_call.1} parent=43 // pred_region
          %403 = sst [smem:[#allocation17]] [#allocation30]
          %404 = sst [smem:[#allocation18]] [#allocation29]
        $region84: #{tpu_custom_call.1} parent=43 // pred_fallthru
          _
        %406 = shalt.err (0)
        %s408 = sshll.u32 %s398, 4
        %s409 = int_to_ptr.hbm [resolvable:$true] %s408
        %s410 = sshll.u32 %s399, 4
        %s411 = int_to_ptr.vmem [resolvable:$true] %s410
        %413 = dma.hbm_to_vmem [thread:$0]  %s409, 16, %s411, %s400
        %s414 = sadd.s32 %s290, 7
        %s415 = sld [smem:[#allocation7 + %s414]]
        %s416 = scalar_lea.hbm %s1, %s415
        %s417 = scalar_lea.vmem [#allocation2], 7
        %s418 = scalar_lea.sflag [#allocation5], 7
        // Predicated region
        $region85: #{tpu_custom_call.1} parent=43 // pred_check
          _
        $region86: #{tpu_custom_call.1} parent=43 // pred_check_branch
          %420 = sbr.rel target = $region88
        $region87: #{tpu_custom_call.1} parent=43 // pred_region
          %421 = sst [smem:[#allocation17]] [#allocation32]
          %422 = sst [smem:[#allocation18]] [#allocation31]
        $region88: #{tpu_custom_call.1} parent=43 // pred_fallthru
          _
        %424 = shalt.err (0)
        %s426 = sshll.u32 %s416, 4
        %s427 = int_to_ptr.hbm [resolvable:$true] %s426
        %s428 = sshll.u32 %s417, 4
        %s429 = int_to_ptr.vmem [resolvable:$true] %s428
        %431 = dma.hbm_to_vmem [thread:$0]  %s427, 16, %s429, %s418
        %s432 = sld [smem:[#allocation7 + %s290]]
        %434 = dma.done [#allocation5], 16
        %s435 = sld [smem:[#allocation7 + %s306]]
        %437 = dma.done %s310, 16
        %s438 = sld [smem:[#allocation7 + %s324]]
        %440 = dma.done %s328, 16
        %s441 = sld [smem:[#allocation7 + %s342]]
        %443 = dma.done %s346, 16
        %s444 = sld [smem:[#allocation7 + %s360]]
        %446 = dma.done %s364, 16
        %s447 = sld [smem:[#allocation7 + %s378]]
        %449 = dma.done %s382, 16
        %s450 = sld [smem:[#allocation7 + %s396]]
        %452 = dma.done %s400, 16
        %s453 = sld [smem:[#allocation7 + %s414]]
        %455 = dma.done %s418, 16
        %vm456 = vcmask 1040384
        %vm457 = vsmask.f32 256
        %vm458 = vmand %vm456, %vm457
        %v459 = vld [vmem:[#allocation3] sm:$0x1]
        %v460 = vsel %vm458, 0, %v459
        %461 = vst [vmem:[#allocation3] sm:$0x1] %v460
        %v462 = vld [vmem:[%s3] sm:$0x1]
        %v463 = vld [vmem:[%s5] sm:$0x1]
        %v464 = vld [vmem:[#allocation2] sm:$0xff]
        %v465 = vpack.c.bf16 %v464, %v464
        %v466 = vld [vmem:[#allocation8] sm:$0xff]
        %v467 = vld [vmem:[#allocation8 + $0x8] sm:$0xf]
        %v468 = vld [vmem:[#allocation8 + $0xc] sm:$0xff]
        %v469 = vld [vmem:[#allocation8 + $0x14] sm:$0xf]
        %v470 = vld [vmem:[#allocation8 + $0x18] sm:$0xff]
        %v471 = vld [vmem:[#allocation8 + $0x20] sm:$0xf]
        %v472 = vld [vmem:[#allocation8 + $0x24] sm:$0xff]
        %v473 = vld [vmem:[#allocation8 + $0x2c] sm:$0xf]
        %v474 = vld [vmem:[#allocation8 + $0x30] sm:$0xff]
        %v475 = vld [vmem:[#allocation8 + $0x38] sm:$0xf]
        %v476 = vld [vmem:[#allocation8 + $0x3c] sm:$0xff]
        %v477 = vld [vmem:[#allocation8 + $0x44] sm:$0xf]
        %v478 = vld [vmem:[#allocation8 + $0x48] sm:$0xff]
        %v479 = vld [vmem:[#allocation8 + $0x50] sm:$0xf]
        %v480 = vld [vmem:[#allocation8 + $0x54] sm:$0xff]
        %v481 = vld [vmem:[#allocation8 + $0x5c] sm:$0xf]
        %v482 = vld [vmem:[#allocation8 + $0x60] sm:$0xff]
        %v483 = vld [vmem:[#allocation8 + $0x68] sm:$0xf]
        %v484 = vld [vmem:[#allocation8 + $0x6c] sm:$0xff]
        %v485 = vld [vmem:[#allocation8 + $0x74] sm:$0xf]
        %v486 = vld [vmem:[#allocation8 + $0x78] sm:$0xff]
        %v487 = vld [vmem:[#allocation8 + $0x80] sm:$0xf]
        %v488 = vld [vmem:[#allocation8 + $0x84] sm:$0xff]
        %v489 = vld [vmem:[#allocation8 + $0x8c] sm:$0xf]
        %v490 = vld [vmem:[#allocation8 + $0x90] sm:$0xff]
        %v491 = vld [vmem:[#allocation8 + $0x98] sm:$0xf]
        %v492 = vld [vmem:[#allocation8 + $0x9c] sm:$0xff]
        %v493 = vld [vmem:[#allocation8 + $0xa4] sm:$0xf]
        %v494 = vld [vmem:[#allocation8 + $0xa8] sm:$0xff]
        %v495 = vld [vmem:[#allocation8 + $0xb0] sm:$0xf]
        %v496 = vld [vmem:[#allocation8 + $0xb4] sm:$0xff]
        %v497 = vld [vmem:[#allocation8 + $0xbc] sm:$0xf]
        %v530 = vunpack.c.l.b16 %v466
        %v531 = vunpack.c.h.b16 %v466
        %v532 = vunpack.c.l.b16 %v467
        %v533 = vunpack.c.l.b16 %v468
        %v534 = vunpack.c.h.b16 %v468
        %v535 = vunpack.c.l.b16 %v469
        %v536 = vunpack.c.l.b16 %v470
        %v537 = vunpack.c.h.b16 %v470
        %v538 = vunpack.c.l.b16 %v471
        %v539 = vunpack.c.l.b16 %v472
        %v540 = vunpack.c.h.b16 %v472
        %v541 = vunpack.c.l.b16 %v473
        %v542 = vunpack.c.l.b16 %v474
        %v543 = vunpack.c.h.b16 %v474
        %v544 = vunpack.c.l.b16 %v475
        %v545 = vunpack.c.l.b16 %v476
        %v546 = vunpack.c.h.b16 %v476
        %v547 = vunpack.c.l.b16 %v477
        %v548 = vunpack.c.l.b16 %v478
        %v549 = vunpack.c.h.b16 %v478
        %v550 = vunpack.c.l.b16 %v479
        %v551 = vunpack.c.l.b16 %v480
        %v552 = vunpack.c.h.b16 %v480
        %v553 = vunpack.c.l.b16 %v481
        %v554 = vunpack.c.l.b16 %v482
        %v555 = vunpack.c.h.b16 %v482
        %v556 = vunpack.c.l.b16 %v483
        %v557 = vunpack.c.l.b16 %v484
        %v558 = vunpack.c.h.b16 %v484
        %v559 = vunpack.c.l.b16 %v485
        %v560 = vunpack.c.l.b16 %v486
        %v561 = vunpack.c.h.b16 %v486
        %v562 = vunpack.c.l.b16 %v487
        %v563 = vunpack.c.l.b16 %v488
        %v564 = vunpack.c.h.b16 %v488
        %v565 = vunpack.c.l.b16 %v489
        %v566 = vunpack.c.l.b16 %v490
        %v567 = vunpack.c.h.b16 %v490
        %v568 = vunpack.c.l.b16 %v491
        %v569 = vunpack.c.l.b16 %v492
        %v570 = vunpack.c.h.b16 %v492
        %v571 = vunpack.c.l.b16 %v493
        %v572 = vunpack.c.l.b16 %v494
        %v573 = vunpack.c.h.b16 %v494
        %v574 = vunpack.c.l.b16 %v495
        %v575 = vunpack.c.l.b16 %v496
        %v576 = vunpack.c.h.b16 %v496
        %v577 = vunpack.c.l.b16 %v497
        %v578 = vpack.c.b16 %v533, %v530
        %v579 = vpack.c.b16 %v534, %v531
        %v580 = vpack.c.b16 %v535, %v532
        %v581 = vpack.c.b16 %v539, %v536
        %v582 = vpack.c.b16 %v540, %v537
        %v583 = vpack.c.b16 %v541, %v538
        %v584 = vpack.c.b16 %v545, %v542
        %v585 = vpack.c.b16 %v546, %v543
        %v586 = vpack.c.b16 %v547, %v544
        %v587 = vpack.c.b16 %v551, %v548
        %v588 = vpack.c.b16 %v552, %v549
        %v589 = vpack.c.b16 %v553, %v550
        %v590 = vpack.c.b16 %v557, %v554
        %v591 = vpack.c.b16 %v558, %v555
        %v592 = vpack.c.b16 %v559, %v556
        %v593 = vpack.c.b16 %v563, %v560
        %v594 = vpack.c.b16 %v564, %v561
        %v595 = vpack.c.b16 %v565, %v562
        %v596 = vpack.c.b16 %v569, %v566
        %v597 = vpack.c.b16 %v570, %v567
        %v598 = vpack.c.b16 %v571, %v568
        %v599 = vpack.c.b16 %v575, %v572
        %v600 = vpack.c.b16 %v576, %v573
        %v601 = vpack.c.b16 %v577, %v574
        %626 = vmatpush.bf16.msra.mxu0 %v599
        %627 = vmatpush.bf16.msra.mxu0 %v596
        %628 = vmatpush.bf16.msra.mxu0 %v593
        %629 = vmatpush.bf16.msra.mxu0 %v590
        %630 = vmatpush.bf16.msra.mxu0 %v587
        %631 = vmatpush.bf16.msra.mxu0 %v584
        %632 = vmatpush.bf16.msra.mxu0 %v581
        %633 = vmatpush.bf16.msra.mxu0 %v578
        %634 = vmatmul.bf16.gmra.mxu0 %v465
        %v635 = vpop.f32.mrf.mxu0
        %v636 = vadd.f32 0.0, %v635
        %v637 = vpop.f32.mrf.mxu0
        %638 = vdwg.mxu0
        %639 = vmatpush.bf16.msra.mxu0 %v600
        %640 = vmatpush.bf16.msra.mxu0 %v597
        %641 = vmatpush.bf16.msra.mxu0 %v594
        %642 = vmatpush.bf16.msra.mxu0 %v591
        %643 = vmatpush.bf16.msra.mxu0 %v588
        %644 = vmatpush.bf16.msra.mxu0 %v585
        %645 = vmatpush.bf16.msra.mxu0 %v582
        %646 = vmatpush.bf16.msra.mxu0 %v579
        %647 = vmatmul.bf16.gmra.mxu0 %v465
        %v648 = vpop.f32.mrf.mxu0
        %v649 = vadd.f32 0.0, %v648
        %v650 = vpop.f32.mrf.mxu0
        %651 = vdwg.mxu0
        %652 = vmatpush.bf16.msra.mxu0 %v601
        %653 = vmatpush.bf16.msra.mxu0 %v598
        %654 = vmatpush.bf16.msra.mxu0 %v595
        %655 = vmatpush.bf16.msra.mxu0 %v592
        %656 = vmatpush.bf16.msra.mxu0 %v589
        %657 = vmatpush.bf16.msra.mxu0 %v586
        %658 = vmatpush.bf16.msra.mxu0 %v583
        %659 = vmatpush.bf16.msra.mxu0 %v580
        %660 = vmatmul.bf16.gmra.mxu0 %v465
        %v661 = vpop.f32.mrf.mxu0
        %v662 = vadd.f32 0.0, %v661
        %v663 = vpop.f32.mrf.mxu0
        %664 = vdwg.mxu0
        %v666 = vrot.slane %v649, 1
        %v668 = vadd.f32 %v636, %v666
        %v670 = vrot.slane %v662, 2
        %v672 = vadd.f32 %v668, %v670
        %v674 = vperm.slane %v462, 0
        %v676 = vadd.f32 %v672, %v674
        %v677 = vmax.f32 %v676, 0.0
        %v678 = vpack.c.bf16 %v677, %v677
        %v680 = vshrl.u32 %v678, 16
        %v682 = vrot.slane %v680, 7
        %v683 = vshll.u32 %v678, 16
        %v685 = vor.u32 %v682, %v683
        %vm687 = vcmask 1043456
        %vm688 = vsmask.f32 3330
        %vm689 = vmand %vm687, %vm688
        %v690 = vld [vmem:[#allocation3] sm:$0xf]
        %v691 = vsel %vm689, %v685, %v690
        %692 = vst [vmem:[#allocation3] sm:$0xf] %v691
        %vm693 = vcmask 1043459
        %vm694 = vsmask.f32 7950
        %vm695 = vmand %vm693, %vm694
        %v696 = vld [vmem:[#allocation3] sm:$0x8]
        %v697 = vsel %vm695, 0, %v696
        %698 = vst [vmem:[#allocation3] sm:$0x8] %v697
        %v699 = vld [vmem:[#allocation3] sm:$0xf]
        %v700 = vld [vmem:[#allocation11] sm:$0xff]
        %v701 = vld [vmem:[#allocation11 + $0x8] sm:$0xf]
        %v702 = vld [vmem:[#allocation11 + $0xc] sm:$0xff]
        %v703 = vld [vmem:[#allocation11 + $0x14] sm:$0xf]
        %v704 = vld [vmem:[#allocation11 + $0x18] sm:$0xff]
        %v705 = vld [vmem:[#allocation11 + $0x20] sm:$0xf]
        %v706 = vld [vmem:[#allocation11 + $0x24] sm:$0xff]
        %v707 = vld [vmem:[#allocation11 + $0x2c] sm:$0xf]
        %v708 = vld [vmem:[#allocation11 + $0x30] sm:$0xff]
        %v709 = vld [vmem:[#allocation11 + $0x38] sm:$0xf]
        %v710 = vld [vmem:[#allocation11 + $0x3c] sm:$0xff]
        %v711 = vld [vmem:[#allocation11 + $0x44] sm:$0xf]
        %v712 = vld [vmem:[#allocation11 + $0x48] sm:$0xff]
        %v713 = vld [vmem:[#allocation11 + $0x50] sm:$0xf]
        %v714 = vld [vmem:[#allocation11 + $0x54] sm:$0xff]
        %v715 = vld [vmem:[#allocation11 + $0x5c] sm:$0xf]
        %v716 = vld [vmem:[#allocation11 + $0x60] sm:$0xff]
        %v717 = vld [vmem:[#allocation11 + $0x68] sm:$0xf]
        %v718 = vld [vmem:[#allocation11 + $0x6c] sm:$0xff]
        %v719 = vld [vmem:[#allocation11 + $0x74] sm:$0xf]
        %v720 = vld [vmem:[#allocation11 + $0x78] sm:$0xff]
        %v721 = vld [vmem:[#allocation11 + $0x80] sm:$0xf]
        %v722 = vld [vmem:[#allocation11 + $0x84] sm:$0xff]
        %v723 = vld [vmem:[#allocation11 + $0x8c] sm:$0xf]
        %v724 = vld [vmem:[#allocation11 + $0x90] sm:$0xff]
        %v725 = vld [vmem:[#allocation11 + $0x98] sm:$0xf]
        %v726 = vld [vmem:[#allocation11 + $0x9c] sm:$0xff]
        %v727 = vld [vmem:[#allocation11 + $0xa4] sm:$0xf]
        %v728 = vld [vmem:[#allocation11 + $0xa8] sm:$0xff]
        %v729 = vld [vmem:[#allocation11 + $0xb0] sm:$0xf]
        %v730 = vld [vmem:[#allocation11 + $0xb4] sm:$0xff]
        %v731 = vld [vmem:[#allocation11 + $0xbc] sm:$0xf]
        %v764 = vunpack.c.l.b16 %v700
        %v765 = vunpack.c.h.b16 %v700
        %v766 = vunpack.c.l.b16 %v701
        %v767 = vunpack.c.l.b16 %v702
        %v768 = vunpack.c.h.b16 %v702
        %v769 = vunpack.c.l.b16 %v703
        %v770 = vunpack.c.l.b16 %v704
        %v771 = vunpack.c.h.b16 %v704
        %v772 = vunpack.c.l.b16 %v705
        %v773 = vunpack.c.l.b16 %v706
        %v774 = vunpack.c.h.b16 %v706
        %v775 = vunpack.c.l.b16 %v707
        %v776 = vunpack.c.l.b16 %v708
        %v777 = vunpack.c.h.b16 %v708
        %v778 = vunpack.c.l.b16 %v709
        %v779 = vunpack.c.l.b16 %v710
        %v780 = vunpack.c.h.b16 %v710
        %v781 = vunpack.c.l.b16 %v711
        %v782 = vunpack.c.l.b16 %v712
        %v783 = vunpack.c.h.b16 %v712
        %v784 = vunpack.c.l.b16 %v713
        %v785 = vunpack.c.l.b16 %v714
        %v786 = vunpack.c.h.b16 %v714
        %v787 = vunpack.c.l.b16 %v715
        %v788 = vunpack.c.l.b16 %v716
        %v789 = vunpack.c.h.b16 %v716
        %v790 = vunpack.c.l.b16 %v717
        %v791 = vunpack.c.l.b16 %v718
        %v792 = vunpack.c.h.b16 %v718
        %v793 = vunpack.c.l.b16 %v719
        %v794 = vunpack.c.l.b16 %v720
        %v795 = vunpack.c.h.b16 %v720
        %v796 = vunpack.c.l.b16 %v721
        %v797 = vunpack.c.l.b16 %v722
        %v798 = vunpack.c.h.b16 %v722
        %v799 = vunpack.c.l.b16 %v723
        %v800 = vunpack.c.l.b16 %v724
        %v801 = vunpack.c.h.b16 %v724
        %v802 = vunpack.c.l.b16 %v725
        %v803 = vunpack.c.l.b16 %v726
        %v804 = vunpack.c.h.b16 %v726
        %v805 = vunpack.c.l.b16 %v727
        %v806 = vunpack.c.l.b16 %v728
        %v807 = vunpack.c.h.b16 %v728
        %v808 = vunpack.c.l.b16 %v729
        %v809 = vunpack.c.l.b16 %v730
        %v810 = vunpack.c.h.b16 %v730
        %v811 = vunpack.c.l.b16 %v731
        %v812 = vpack.c.b16 %v767, %v764
        %v813 = vpack.c.b16 %v768, %v765
        %v814 = vpack.c.b16 %v769, %v766
        %v815 = vpack.c.b16 %v773, %v770
        %v816 = vpack.c.b16 %v774, %v771
        %v817 = vpack.c.b16 %v775, %v772
        %v818 = vpack.c.b16 %v779, %v776
        %v819 = vpack.c.b16 %v780, %v777
        %v820 = vpack.c.b16 %v781, %v778
        %v821 = vpack.c.b16 %v785, %v782
        %v822 = vpack.c.b16 %v786, %v783
        %v823 = vpack.c.b16 %v787, %v784
        %v824 = vpack.c.b16 %v791, %v788
        %v825 = vpack.c.b16 %v792, %v789
        %v826 = vpack.c.b16 %v793, %v790
        %v827 = vpack.c.b16 %v797, %v794
        %v828 = vpack.c.b16 %v798, %v795
        %v829 = vpack.c.b16 %v799, %v796
        %v830 = vpack.c.b16 %v803, %v800
        %v831 = vpack.c.b16 %v804, %v801
        %v832 = vpack.c.b16 %v805, %v802
        %v833 = vpack.c.b16 %v809, %v806
        %v834 = vpack.c.b16 %v810, %v807
        %v835 = vpack.c.b16 %v811, %v808
        %860 = vmatpush.bf16.msra.mxu0 %v833
        %861 = vmatpush.bf16.msra.mxu0 %v830
        %862 = vmatpush.bf16.msra.mxu0 %v827
        %863 = vmatpush.bf16.msra.mxu0 %v824
        %864 = vmatpush.bf16.msra.mxu0 %v821
        %865 = vmatpush.bf16.msra.mxu0 %v818
        %866 = vmatpush.bf16.msra.mxu0 %v815
        %867 = vmatpush.bf16.msra.mxu0 %v812
        %868 = vmatmul.bf16.gmra.mxu0 %v699
        %v869 = vpop.f32.mrf.mxu0
        %v870 = vadd.f32 0.0, %v869
        %v871 = vpop.f32.mrf.mxu0
        %872 = vdwg.mxu0
        %873 = vmatpush.bf16.msra.mxu0 %v834
        %874 = vmatpush.bf16.msra.mxu0 %v831
        %875 = vmatpush.bf16.msra.mxu0 %v828
        %876 = vmatpush.bf16.msra.mxu0 %v825
        %877 = vmatpush.bf16.msra.mxu0 %v822
        %878 = vmatpush.bf16.msra.mxu0 %v819
        %879 = vmatpush.bf16.msra.mxu0 %v816
        %880 = vmatpush.bf16.msra.mxu0 %v813
        %881 = vmatmul.bf16.gmra.mxu0 %v699
        %v882 = vpop.f32.mrf.mxu0
        %v883 = vadd.f32 0.0, %v882
        %v884 = vpop.f32.mrf.mxu0
        %885 = vdwg.mxu0
        %886 = vmatpush.bf16.msra.mxu0 %v835
        %887 = vmatpush.bf16.msra.mxu0 %v832
        %888 = vmatpush.bf16.msra.mxu0 %v829
        %889 = vmatpush.bf16.msra.mxu0 %v826
        %890 = vmatpush.bf16.msra.mxu0 %v823
        %891 = vmatpush.bf16.msra.mxu0 %v820
        %892 = vmatpush.bf16.msra.mxu0 %v817
        %893 = vmatpush.bf16.msra.mxu0 %v814
        %894 = vmatmul.bf16.gmra.mxu0 %v699
        %v895 = vpop.f32.mrf.mxu0
        %v896 = vadd.f32 0.0, %v895
        %v897 = vpop.f32.mrf.mxu0
        %898 = vdwg.mxu0
        %v900 = vrot.slane %v883, 1
        %v902 = vadd.f32 %v870, %v900
        %v904 = vrot.slane %v896, 2
        %v906 = vadd.f32 %v902, %v904
        %v908 = vperm.slane %v463, 0
        %v910 = vadd.f32 %v906, %v908
        %v911 = vmax.f32 %v910, 0.0
        %v912 = vpack.c.bf16 %v911, %v911
        %v914 = vshrl.u32 %v912, 16
        %v916 = vrot.slane %v914, 7
        %v917 = vshll.u32 %v912, 16
        %v919 = vor.u32 %v916, %v917
        %v921 = vsel %vm689, %v919, %v699
        %922 = vst [vmem:[#allocation3] sm:$0xf] %v921
        %v923 = vld [vmem:[#allocation3] sm:$0x8]
        %v924 = vsel %vm695, 0, %v923
        %925 = vst [vmem:[#allocation3] sm:$0x8] %v924
        %v926 = vld [vmem:[#allocation3] sm:$0xf]
        %v927 = vld [vmem:[#allocation11] sm:$0xff]
        %v928 = vld [vmem:[#allocation11 + $0x8] sm:$0xf]
        %v929 = vld [vmem:[#allocation11 + $0xc] sm:$0xff]
        %v930 = vld [vmem:[#allocation11 + $0x14] sm:$0xf]
        %v931 = vld [vmem:[#allocation11 + $0x18] sm:$0xff]
        %v932 = vld [vmem:[#allocation11 + $0x20] sm:$0xf]
        %v933 = vld [vmem:[#allocation11 + $0x24] sm:$0xff]
        %v934 = vld [vmem:[#allocation11 + $0x2c] sm:$0xf]
        %v935 = vld [vmem:[#allocation11 + $0x30] sm:$0xff]
        %v936 = vld [vmem:[#allocation11 + $0x38] sm:$0xf]
        %v937 = vld [vmem:[#allocation11 + $0x3c] sm:$0xff]
        %v938 = vld [vmem:[#allocation11 + $0x44] sm:$0xf]
        %v939 = vld [vmem:[#allocation11 + $0x48] sm:$0xff]
        %v940 = vld [vmem:[#allocation11 + $0x50] sm:$0xf]
        %v941 = vld [vmem:[#allocation11 + $0x54] sm:$0xff]
        %v942 = vld [vmem:[#allocation11 + $0x5c] sm:$0xf]
        %v943 = vld [vmem:[#allocation11 + $0x60] sm:$0xff]
        %v944 = vld [vmem:[#allocation11 + $0x68] sm:$0xf]
        %v945 = vld [vmem:[#allocation11 + $0x6c] sm:$0xff]
        %v946 = vld [vmem:[#allocation11 + $0x74] sm:$0xf]
        %v947 = vld [vmem:[#allocation11 + $0x78] sm:$0xff]
        %v948 = vld [vmem:[#allocation11 + $0x80] sm:$0xf]
        %v949 = vld [vmem:[#allocation11 + $0x84] sm:$0xff]
        %v950 = vld [vmem:[#allocation11 + $0x8c] sm:$0xf]
        %v951 = vld [vmem:[#allocation11 + $0x90] sm:$0xff]
        %v952 = vld [vmem:[#allocation11 + $0x98] sm:$0xf]
        %v953 = vld [vmem:[#allocation11 + $0x9c] sm:$0xff]
        %v954 = vld [vmem:[#allocation11 + $0xa4] sm:$0xf]
        %v955 = vld [vmem:[#allocation11 + $0xa8] sm:$0xff]
        %v956 = vld [vmem:[#allocation11 + $0xb0] sm:$0xf]
        %v957 = vld [vmem:[#allocation11 + $0xb4] sm:$0xff]
        %v958 = vld [vmem:[#allocation11 + $0xbc] sm:$0xf]
        %v991 = vunpack.c.l.b16 %v927
        %v992 = vunpack.c.h.b16 %v927
        %v993 = vunpack.c.l.b16 %v928
        %v994 = vunpack.c.l.b16 %v929
        %v995 = vunpack.c.h.b16 %v929
        %v996 = vunpack.c.l.b16 %v930
        %v997 = vunpack.c.l.b16 %v931
        %v998 = vunpack.c.h.b16 %v931
        %v999 = vunpack.c.l.b16 %v932
        %v1000 = vunpack.c.l.b16 %v933
        %v1001 = vunpack.c.h.b16 %v933
        %v1002 = vunpack.c.l.b16 %v934
        %v1003 = vunpack.c.l.b16 %v935
        %v1004 = vunpack.c.h.b16 %v935
        %v1005 = vunpack.c.l.b16 %v936
        %v1006 = vunpack.c.l.b16 %v937
        %v1007 = vunpack.c.h.b16 %v937
        %v1008 = vunpack.c.l.b16 %v938
        %v1009 = vunpack.c.l.b16 %v939
        %v1010 = vunpack.c.h.b16 %v939
        %v1011 = vunpack.c.l.b16 %v940
        %v1012 = vunpack.c.l.b16 %v941
        %v1013 = vunpack.c.h.b16 %v941
        %v1014 = vunpack.c.l.b16 %v942
        %v1015 = vunpack.c.l.b16 %v943
        %v1016 = vunpack.c.h.b16 %v943
        %v1017 = vunpack.c.l.b16 %v944
        %v1018 = vunpack.c.l.b16 %v945
        %v1019 = vunpack.c.h.b16 %v945
        %v1020 = vunpack.c.l.b16 %v946
        %v1021 = vunpack.c.l.b16 %v947
        %v1022 = vunpack.c.h.b16 %v947
        %v1023 = vunpack.c.l.b16 %v948
        %v1024 = vunpack.c.l.b16 %v949
        %v1025 = vunpack.c.h.b16 %v949
        %v1026 = vunpack.c.l.b16 %v950
        %v1027 = vunpack.c.l.b16 %v951
        %v1028 = vunpack.c.h.b16 %v951
        %v1029 = vunpack.c.l.b16 %v952
        %v1030 = vunpack.c.l.b16 %v953
        %v1031 = vunpack.c.h.b16 %v953
        %v1032 = vunpack.c.l.b16 %v954
        %v1033 = vunpack.c.l.b16 %v955
        %v1034 = vunpack.c.h.b16 %v955
        %v1035 = vunpack.c.l.b16 %v956
        %v1036 = vunpack.c.l.b16 %v957
        %v1037 = vunpack.c.h.b16 %v957
        %v1038 = vunpack.c.l.b16 %v958
        %v1039 = vpack.c.b16 %v994, %v991
        %v1040 = vpack.c.b16 %v995, %v992
        %v1041 = vpack.c.b16 %v996, %v993
        %v1042 = vpack.c.b16 %v1000, %v997
        %v1043 = vpack.c.b16 %v1001, %v998
        %v1044 = vpack.c.b16 %v1002, %v999
        %v1045 = vpack.c.b16 %v1006, %v1003
        %v1046 = vpack.c.b16 %v1007, %v1004
        %v1047 = vpack.c.b16 %v1008, %v1005
        %v1048 = vpack.c.b16 %v1012, %v1009
        %v1049 = vpack.c.b16 %v1013, %v1010
        %v1050 = vpack.c.b16 %v1014, %v1011
        %v1051 = vpack.c.b16 %v1018, %v1015
        %v1052 = vpack.c.b16 %v1019, %v1016
        %v1053 = vpack.c.b16 %v1020, %v1017
        %v1054 = vpack.c.b16 %v1024, %v1021
        %v1055 = vpack.c.b16 %v1025, %v1022
        %v1056 = vpack.c.b16 %v1026, %v1023
        %v1057 = vpack.c.b16 %v1030, %v1027
        %v1058 = vpack.c.b16 %v1031, %v1028
        %v1059 = vpack.c.b16 %v1032, %v1029
        %v1060 = vpack.c.b16 %v1036, %v1033
        %v1061 = vpack.c.b16 %v1037, %v1034
        %v1062 = vpack.c.b16 %v1038, %v1035
        %1087 = vmatpush.bf16.msra.mxu0 %v1060
        %1088 = vmatpush.bf16.msra.mxu0 %v1057
        %1089 = vmatpush.bf16.msra.mxu0 %v1054
        %1090 = vmatpush.bf16.msra.mxu0 %v1051
        %1091 = vmatpush.bf16.msra.mxu0 %v1048
        %1092 = vmatpush.bf16.msra.mxu0 %v1045
        %1093 = vmatpush.bf16.msra.mxu0 %v1042
        %1094 = vmatpush.bf16.msra.mxu0 %v1039
        %1095 = vmatmul.bf16.gmra.mxu0 %v926
        %v1096 = vpop.f32.mrf.mxu0
        %v1097 = vadd.f32 0.0, %v1096
        %v1098 = vpop.f32.mrf.mxu0
        %1099 = vdwg.mxu0
        %1100 = vmatpush.bf16.msra.mxu0 %v1061
        %1101 = vmatpush.bf16.msra.mxu0 %v1058
        %1102 = vmatpush.bf16.msra.mxu0 %v1055
        %1103 = vmatpush.bf16.msra.mxu0 %v1052
        %1104 = vmatpush.bf16.msra.mxu0 %v1049
        %1105 = vmatpush.bf16.msra.mxu0 %v1046
        %1106 = vmatpush.bf16.msra.mxu0 %v1043
        %1107 = vmatpush.bf16.msra.mxu0 %v1040
        %1108 = vmatmul.bf16.gmra.mxu0 %v926
        %v1109 = vpop.f32.mrf.mxu0
        %v1110 = vadd.f32 0.0, %v1109
        %v1111 = vpop.f32.mrf.mxu0
        %1112 = vdwg.mxu0
        %1113 = vmatpush.bf16.msra.mxu0 %v1062
        %1114 = vmatpush.bf16.msra.mxu0 %v1059
        %1115 = vmatpush.bf16.msra.mxu0 %v1056
        %1116 = vmatpush.bf16.msra.mxu0 %v1053
        %1117 = vmatpush.bf16.msra.mxu0 %v1050
        %1118 = vmatpush.bf16.msra.mxu0 %v1047
        %1119 = vmatpush.bf16.msra.mxu0 %v1044
        %1120 = vmatpush.bf16.msra.mxu0 %v1041
        %1121 = vmatmul.bf16.gmra.mxu0 %v926
        %v1122 = vpop.f32.mrf.mxu0
        %v1123 = vadd.f32 0.0, %v1122
        %v1124 = vpop.f32.mrf.mxu0
        %1125 = vdwg.mxu0
        %v1127 = vrot.slane %v1110, 1
        %v1129 = vadd.f32 %v1097, %v1127
        %v1131 = vrot.slane %v1123, 2
        %v1133 = vadd.f32 %v1129, %v1131
        %v1134 = vadd.f32 %v1133, %v908
        %1135 = vst [vmem:[#allocation4] sm:$0x3f] %v1134
        %1136 = vst [vmem:[#allocation4 + $0x6] sm:$0x1] 0.0
        %v1137 = vld [vmem:[#allocation4] ss:$2 sm:$0x7]
        %s1138 = scalar_lea.vmem [#allocation4], 1
        %v1139 = vld [vmem:[%s1138] ss:$2 sm:$0x7]
        %s1140 = scalar_lea.vmem [#allocation4], 2
        %v1141 = vld [vmem:[%s1140] ss:$2 sm:$0x7]
        %v1142 = vmax.f32 %v1137, %v1139
        %v1143 = vmax.f32 %v1142, %v1141
        %v1144 = vmax.f32 %v1143, 0.0
        %v1145 = vpack.c.bf16 %v1144, %v1144
        %v1147 = vshrl.u32 %v1145, 16
        %v1149 = vrot.slane %v1147, 7
        %v1150 = vshll.u32 %v1145, 16
        %v1152 = vor.u32 %v1149, %v1150
        %vm1154 = vcmask 1041408
        %vm1155 = vsmask.f32 7938
        %vm1156 = vmand %vm1154, %vm1155
        %v1157 = vld [vmem:[#allocation3] sm:$0x3]
        %v1158 = vsel %vm1156, %v1152, %v1157
        %1159 = vst [vmem:[#allocation3] sm:$0x3] %v1158
        %vm1160 = vcmask 1042434
        %vm1161 = vsmask.f32 2304
        %vm1162 = vmand %vm1160, %vm1161
        %v1163 = vld [vmem:[#allocation3] sm:$0x4]
        %v1164 = vsel %vm1162, 0, %v1163
        %1165 = vst [vmem:[#allocation3] sm:$0x4] %v1164
        %v1166 = vld [vmem:[#allocation3] sm:$0x7]
        %v1167 = vld [vmem:[#allocation11] sm:$0xff]
        %v1168 = vld [vmem:[#allocation11 + $0x8] sm:$0xf]
        %v1169 = vld [vmem:[#allocation11 + $0xc] sm:$0xff]
        %v1170 = vld [vmem:[#allocation11 + $0x14] sm:$0xf]
        %v1171 = vld [vmem:[#allocation11 + $0x18] sm:$0xff]
        %v1172 = vld [vmem:[#allocation11 + $0x20] sm:$0xf]
        %v1173 = vld [vmem:[#allocation11 + $0x24] sm:$0xff]
        %v1174 = vld [vmem:[#allocation11 + $0x2c] sm:$0xf]
        %v1175 = vld [vmem:[#allocation11 + $0x30] sm:$0xff]
        %v1176 = vld [vmem:[#allocation11 + $0x38] sm:$0xf]
        %v1177 = vld [vmem:[#allocation11 + $0x3c] sm:$0xff]
        %v1178 = vld [vmem:[#allocation11 + $0x44] sm:$0xf]
        %v1179 = vld [vmem:[#allocation11 + $0x48] sm:$0xff]
        %v1180 = vld [vmem:[#allocation11 + $0x50] sm:$0xf]
        %v1181 = vld [vmem:[#allocation11 + $0x54] sm:$0xff]
        %v1182 = vld [vmem:[#allocation11 + $0x5c] sm:$0xf]
        %v1183 = vld [vmem:[#allocation11 + $0x60] sm:$0xff]
        %v1184 = vld [vmem:[#allocation11 + $0x68] sm:$0xf]
        %v1185 = vld [vmem:[#allocation11 + $0x6c] sm:$0xff]
        %v1186 = vld [vmem:[#allocation11 + $0x74] sm:$0xf]
        %v1187 = vld [vmem:[#allocation11 + $0x78] sm:$0xff]
        %v1188 = vld [vmem:[#allocation11 + $0x80] sm:$0xf]
        %v1189 = vld [vmem:[#allocation11 + $0x84] sm:$0xff]
        %v1190 = vld [vmem:[#allocation11 + $0x8c] sm:$0xf]
        %v1191 = vld [vmem:[#allocation11 + $0x90] sm:$0xff]
        %v1192 = vld [vmem:[#allocation11 + $0x98] sm:$0xf]
        %v1193 = vld [vmem:[#allocation11 + $0x9c] sm:$0xff]
        %v1194 = vld [vmem:[#allocation11 + $0xa4] sm:$0xf]
        %v1195 = vld [vmem:[#allocation11 + $0xa8] sm:$0xff]
        %v1196 = vld [vmem:[#allocation11 + $0xb0] sm:$0xf]
        %v1197 = vld [vmem:[#allocation11 + $0xb4] sm:$0xff]
        %v1198 = vld [vmem:[#allocation11 + $0xbc] sm:$0xf]
        %v1231 = vunpack.c.l.b16 %v1167
        %v1232 = vunpack.c.h.b16 %v1167
        %v1233 = vunpack.c.l.b16 %v1168
        %v1234 = vunpack.c.l.b16 %v1169
        %v1235 = vunpack.c.h.b16 %v1169
        %v1236 = vunpack.c.l.b16 %v1170
        %v1237 = vunpack.c.l.b16 %v1171
        %v1238 = vunpack.c.h.b16 %v1171
        %v1239 = vunpack.c.l.b16 %v1172
        %v1240 = vunpack.c.l.b16 %v1173
        %v1241 = vunpack.c.h.b16 %v1173
        %v1242 = vunpack.c.l.b16 %v1174
        %v1243 = vunpack.c.l.b16 %v1175
        %v1244 = vunpack.c.h.b16 %v1175
        %v1245 = vunpack.c.l.b16 %v1176
        %v1246 = vunpack.c.l.b16 %v1177
        %v1247 = vunpack.c.h.b16 %v1177
        %v1248 = vunpack.c.l.b16 %v1178
        %v1249 = vunpack.c.l.b16 %v1179
        %v1250 = vunpack.c.h.b16 %v1179
        %v1251 = vunpack.c.l.b16 %v1180
        %v1252 = vunpack.c.l.b16 %v1181
        %v1253 = vunpack.c.h.b16 %v1181
        %v1254 = vunpack.c.l.b16 %v1182
        %v1255 = vunpack.c.l.b16 %v1183
        %v1256 = vunpack.c.h.b16 %v1183
        %v1257 = vunpack.c.l.b16 %v1184
        %v1258 = vunpack.c.l.b16 %v1185
        %v1259 = vunpack.c.h.b16 %v1185
        %v1260 = vunpack.c.l.b16 %v1186
        %v1261 = vunpack.c.l.b16 %v1187
        %v1262 = vunpack.c.h.b16 %v1187
        %v1263 = vunpack.c.l.b16 %v1188
        %v1264 = vunpack.c.l.b16 %v1189
        %v1265 = vunpack.c.h.b16 %v1189
        %v1266 = vunpack.c.l.b16 %v1190
        %v1267 = vunpack.c.l.b16 %v1191
        %v1268 = vunpack.c.h.b16 %v1191
        %v1269 = vunpack.c.l.b16 %v1192
        %v1270 = vunpack.c.l.b16 %v1193
        %v1271 = vunpack.c.h.b16 %v1193
        %v1272 = vunpack.c.l.b16 %v1194
        %v1273 = vunpack.c.l.b16 %v1195
        %v1274 = vunpack.c.h.b16 %v1195
        %v1275 = vunpack.c.l.b16 %v1196
        %v1276 = vunpack.c.l.b16 %v1197
        %v1277 = vunpack.c.h.b16 %v1197
        %v1278 = vunpack.c.l.b16 %v1198
        %v1279 = vpack.c.b16 %v1234, %v1231
        %v1280 = vpack.c.b16 %v1235, %v1232
        %v1281 = vpack.c.b16 %v1236, %v1233
        %v1282 = vpack.c.b16 %v1240, %v1237
        %v1283 = vpack.c.b16 %v1241, %v1238
        %v1284 = vpack.c.b16 %v1242, %v1239
        %v1285 = vpack.c.b16 %v1246, %v1243
        %v1286 = vpack.c.b16 %v1247, %v1244
        %v1287 = vpack.c.b16 %v1248, %v1245
        %v1288 = vpack.c.b16 %v1252, %v1249
        %v1289 = vpack.c.b16 %v1253, %v1250
        %v1290 = vpack.c.b16 %v1254, %v1251
        %v1291 = vpack.c.b16 %v1258, %v1255
        %v1292 = vpack.c.b16 %v1259, %v1256
        %v1293 = vpack.c.b16 %v1260, %v1257
        %v1294 = vpack.c.b16 %v1264, %v1261
        %v1295 = vpack.c.b16 %v1265, %v1262
        %v1296 = vpack.c.b16 %v1266, %v1263
        %v1297 = vpack.c.b16 %v1270, %v1267
        %v1298 = vpack.c.b16 %v1271, %v1268
        %v1299 = vpack.c.b16 %v1272, %v1269
        %v1300 = vpack.c.b16 %v1276, %v1273
        %v1301 = vpack.c.b16 %v1277, %v1274
        %v1302 = vpack.c.b16 %v1278, %v1275
        %1327 = vmatpush.bf16.msra.mxu0 %v1300
        %1328 = vmatpush.bf16.msra.mxu0 %v1297
        %1329 = vmatpush.bf16.msra.mxu0 %v1294
        %1330 = vmatpush.bf16.msra.mxu0 %v1291
        %1331 = vmatpush.bf16.msra.mxu0 %v1288
        %1332 = vmatpush.bf16.msra.mxu0 %v1285
        %1333 = vmatpush.bf16.msra.mxu0 %v1282
        %1334 = vmatpush.bf16.msra.mxu0 %v1279
        %1335 = vmatmul.bf16.gmra.mxu0 %v1166
        %v1336 = vpop.f32.mrf.mxu0
        %v1337 = vadd.f32 0.0, %v1336
        %v1338 = vpop.f32.mrf.mxu0
        %1339 = vdwg.mxu0
        %1340 = vmatpush.bf16.msra.mxu0 %v1301
        %1341 = vmatpush.bf16.msra.mxu0 %v1298
        %1342 = vmatpush.bf16.msra.mxu0 %v1295
        %1343 = vmatpush.bf16.msra.mxu0 %v1292
        %1344 = vmatpush.bf16.msra.mxu0 %v1289
        %1345 = vmatpush.bf16.msra.mxu0 %v1286
        %1346 = vmatpush.bf16.msra.mxu0 %v1283
        %1347 = vmatpush.bf16.msra.mxu0 %v1280
        %1348 = vmatmul.bf16.gmra.mxu0 %v1166
        %v1349 = vpop.f32.mrf.mxu0
        %v1350 = vadd.f32 0.0, %v1349
        %v1351 = vpop.f32.mrf.mxu0
        %1352 = vdwg.mxu0
        %1353 = vmatpush.bf16.msra.mxu0 %v1302
        %1354 = vmatpush.bf16.msra.mxu0 %v1299
        %1355 = vmatpush.bf16.msra.mxu0 %v1296
        %1356 = vmatpush.bf16.msra.mxu0 %v1293
        %1357 = vmatpush.bf16.msra.mxu0 %v1290
        %1358 = vmatpush.bf16.msra.mxu0 %v1287
        %1359 = vmatpush.bf16.msra.mxu0 %v1284
        %1360 = vmatpush.bf16.msra.mxu0 %v1281
        %1361 = vmatmul.bf16.gmra.mxu0 %v1166
        %v1362 = vpop.f32.mrf.mxu0
        %v1363 = vadd.f32 0.0, %v1362
        %v1364 = vpop.f32.mrf.mxu0
        %1365 = vdwg.mxu0
        %v1367 = vrot.slane %v1350, 1
        %v1369 = vadd.f32 %v1337, %v1367
        %v1371 = vrot.slane %v1363, 2
        %v1373 = vadd.f32 %v1369, %v1371
        %v1374 = vadd.f32 %v1373, %v908
        %v1375 = vmax.f32 %v1374, 0.0
        %v1376 = vpack.c.bf16 %v1375, %v1375
        %v1378 = vshrl.u32 %v1376, 16
        %v1380 = vrot.slane %v1378, 7
        %v1381 = vshll.u32 %v1376, 16
        %v1383 = vor.u32 %v1380, %v1381
        %v1385 = vld [vmem:[#allocation3] sm:$0x3]
        %v1386 = vsel %vm1156, %v1383, %v1385
        %1387 = vst [vmem:[#allocation3] sm:$0x3] %v1386
        %v1388 = vld [vmem:[#allocation3] sm:$0x4]
        %v1389 = vsel %vm1162, 0, %v1388
        %1390 = vst [vmem:[#allocation3] sm:$0x4] %v1389
        %v1391 = vld [vmem:[#allocation3] sm:$0x7]
        %v1392 = vld [vmem:[#allocation11] sm:$0xff]
        %v1393 = vld [vmem:[#allocation11 + $0x8] sm:$0xf]
        %v1394 = vld [vmem:[#allocation11 + $0xc] sm:$0xff]
        %v1395 = vld [vmem:[#allocation11 + $0x14] sm:$0xf]
        %v1396 = vld [vmem:[#allocation11 + $0x18] sm:$0xff]
        %v1397 = vld [vmem:[#allocation11 + $0x20] sm:$0xf]
        %v1398 = vld [vmem:[#allocation11 + $0x24] sm:$0xff]
        %v1399 = vld [vmem:[#allocation11 + $0x2c] sm:$0xf]
        %v1400 = vld [vmem:[#allocation11 + $0x30] sm:$0xff]
        %v1401 = vld [vmem:[#allocation11 + $0x38] sm:$0xf]
        %v1402 = vld [vmem:[#allocation11 + $0x3c] sm:$0xff]
        %v1403 = vld [vmem:[#allocation11 + $0x44] sm:$0xf]
        %v1404 = vld [vmem:[#allocation11 + $0x48] sm:$0xff]
        %v1405 = vld [vmem:[#allocation11 + $0x50] sm:$0xf]
        %v1406 = vld [vmem:[#allocation11 + $0x54] sm:$0xff]
        %v1407 = vld [vmem:[#allocation11 + $0x5c] sm:$0xf]
        %v1408 = vld [vmem:[#allocation11 + $0x60] sm:$0xff]
        %v1409 = vld [vmem:[#allocation11 + $0x68] sm:$0xf]
        %v1410 = vld [vmem:[#allocation11 + $0x6c] sm:$0xff]
        %v1411 = vld [vmem:[#allocation11 + $0x74] sm:$0xf]
        %v1412 = vld [vmem:[#allocation11 + $0x78] sm:$0xff]
        %v1413 = vld [vmem:[#allocation11 + $0x80] sm:$0xf]
        %v1414 = vld [vmem:[#allocation11 + $0x84] sm:$0xff]
        %v1415 = vld [vmem:[#allocation11 + $0x8c] sm:$0xf]
        %v1416 = vld [vmem:[#allocation11 + $0x90] sm:$0xff]
        %v1417 = vld [vmem:[#allocation11 + $0x98] sm:$0xf]
        %v1418 = vld [vmem:[#allocation11 + $0x9c] sm:$0xff]
        %v1419 = vld [vmem:[#allocation11 + $0xa4] sm:$0xf]
        %v1420 = vld [vmem:[#allocation11 + $0xa8] sm:$0xff]
        %v1421 = vld [vmem:[#allocation11 + $0xb0] sm:$0xf]
        %v1422 = vld [vmem:[#allocation11 + $0xb4] sm:$0xff]
        %v1423 = vld [vmem:[#allocation11 + $0xbc] sm:$0xf]
        %v1456 = vunpack.c.l.b16 %v1392
        %v1457 = vunpack.c.h.b16 %v1392
        %v1458 = vunpack.c.l.b16 %v1393
        %v1459 = vunpack.c.l.b16 %v1394
        %v1460 = vunpack.c.h.b16 %v1394
        %v1461 = vunpack.c.l.b16 %v1395
        %v1462 = vunpack.c.l.b16 %v1396
        %v1463 = vunpack.c.h.b16 %v1396
        %v1464 = vunpack.c.l.b16 %v1397
        %v1465 = vunpack.c.l.b16 %v1398
        %v1466 = vunpack.c.h.b16 %v1398
        %v1467 = vunpack.c.l.b16 %v1399
        %v1468 = vunpack.c.l.b16 %v1400
        %v1469 = vunpack.c.h.b16 %v1400
        %v1470 = vunpack.c.l.b16 %v1401
        %v1471 = vunpack.c.l.b16 %v1402
        %v1472 = vunpack.c.h.b16 %v1402
        %v1473 = vunpack.c.l.b16 %v1403
        %v1474 = vunpack.c.l.b16 %v1404
        %v1475 = vunpack.c.h.b16 %v1404
        %v1476 = vunpack.c.l.b16 %v1405
        %v1477 = vunpack.c.l.b16 %v1406
        %v1478 = vunpack.c.h.b16 %v1406
        %v1479 = vunpack.c.l.b16 %v1407
        %v1480 = vunpack.c.l.b16 %v1408
        %v1481 = vunpack.c.h.b16 %v1408
        %v1482 = vunpack.c.l.b16 %v1409
        %v1483 = vunpack.c.l.b16 %v1410
        %v1484 = vunpack.c.h.b16 %v1410
        %v1485 = vunpack.c.l.b16 %v1411
        %v1486 = vunpack.c.l.b16 %v1412
        %v1487 = vunpack.c.h.b16 %v1412
        %v1488 = vunpack.c.l.b16 %v1413
        %v1489 = vunpack.c.l.b16 %v1414
        %v1490 = vunpack.c.h.b16 %v1414
        %v1491 = vunpack.c.l.b16 %v1415
        %v1492 = vunpack.c.l.b16 %v1416
        %v1493 = vunpack.c.h.b16 %v1416
        %v1494 = vunpack.c.l.b16 %v1417
        %v1495 = vunpack.c.l.b16 %v1418
        %v1496 = vunpack.c.h.b16 %v1418
        %v1497 = vunpack.c.l.b16 %v1419
        %v1498 = vunpack.c.l.b16 %v1420
        %v1499 = vunpack.c.h.b16 %v1420
        %v1500 = vunpack.c.l.b16 %v1421
        %v1501 = vunpack.c.l.b16 %v1422
        %v1502 = vunpack.c.h.b16 %v1422
        %v1503 = vunpack.c.l.b16 %v1423
        %v1504 = vpack.c.b16 %v1459, %v1456
        %v1505 = vpack.c.b16 %v1460, %v1457
        %v1506 = vpack.c.b16 %v1461, %v1458
        %v1507 = vpack.c.b16 %v1465, %v1462
        %v1508 = vpack.c.b16 %v1466, %v1463
        %v1509 = vpack.c.b16 %v1467, %v1464
        %v1510 = vpack.c.b16 %v1471, %v1468
        %v1511 = vpack.c.b16 %v1472, %v1469
        %v1512 = vpack.c.b16 %v1473, %v1470
        %v1513 = vpack.c.b16 %v1477, %v1474
        %v1514 = vpack.c.b16 %v1478, %v1475
        %v1515 = vpack.c.b16 %v1479, %v1476
        %v1516 = vpack.c.b16 %v1483, %v1480
        %v1517 = vpack.c.b16 %v1484, %v1481
        %v1518 = vpack.c.b16 %v1485, %v1482
        %v1519 = vpack.c.b16 %v1489, %v1486
        %v1520 = vpack.c.b16 %v1490, %v1487
        %v1521 = vpack.c.b16 %v1491, %v1488
        %v1522 = vpack.c.b16 %v1495, %v1492
        %v1523 = vpack.c.b16 %v1496, %v1493
        %v1524 = vpack.c.b16 %v1497, %v1494
        %v1525 = vpack.c.b16 %v1501, %v1498
        %v1526 = vpack.c.b16 %v1502, %v1499
        %v1527 = vpack.c.b16 %v1503, %v1500
        %1552 = vmatpush.bf16.msra.mxu0 %v1525
        %1553 = vmatpush.bf16.msra.mxu0 %v1522
        %1554 = vmatpush.bf16.msra.mxu0 %v1519
        %1555 = vmatpush.bf16.msra.mxu0 %v1516
        %1556 = vmatpush.bf16.msra.mxu0 %v1513
        %1557 = vmatpush.bf16.msra.mxu0 %v1510
        %1558 = vmatpush.bf16.msra.mxu0 %v1507
        %1559 = vmatpush.bf16.msra.mxu0 %v1504
        %1560 = vmatmul.bf16.gmra.mxu0 %v1391
        %v1561 = vpop.f32.mrf.mxu0
        %v1562 = vadd.f32 0.0, %v1561
        %v1563 = vpop.f32.mrf.mxu0
        %1564 = vdwg.mxu0
        %1565 = vmatpush.bf16.msra.mxu0 %v1526
        %1566 = vmatpush.bf16.msra.mxu0 %v1523
        %1567 = vmatpush.bf16.msra.mxu0 %v1520
        %1568 = vmatpush.bf16.msra.mxu0 %v1517
        %1569 = vmatpush.bf16.msra.mxu0 %v1514
        %1570 = vmatpush.bf16.msra.mxu0 %v1511
        %1571 = vmatpush.bf16.msra.mxu0 %v1508
        %1572 = vmatpush.bf16.msra.mxu0 %v1505
        %1573 = vmatmul.bf16.gmra.mxu0 %v1391
        %v1574 = vpop.f32.mrf.mxu0
        %v1575 = vadd.f32 0.0, %v1574
        %v1576 = vpop.f32.mrf.mxu0
        %1577 = vdwg.mxu0
        %1578 = vmatpush.bf16.msra.mxu0 %v1527
        %1579 = vmatpush.bf16.msra.mxu0 %v1524
        %1580 = vmatpush.bf16.msra.mxu0 %v1521
        %1581 = vmatpush.bf16.msra.mxu0 %v1518
        %1582 = vmatpush.bf16.msra.mxu0 %v1515
        %1583 = vmatpush.bf16.msra.mxu0 %v1512
        %1584 = vmatpush.bf16.msra.mxu0 %v1509
        %1585 = vmatpush.bf16.msra.mxu0 %v1506
        %1586 = vmatmul.bf16.gmra.mxu0 %v1391
        %v1587 = vpop.f32.mrf.mxu0
        %v1588 = vadd.f32 0.0, %v1587
        %v1589 = vpop.f32.mrf.mxu0
        %1590 = vdwg.mxu0
        %v1592 = vrot.slane %v1575, 1
        %v1594 = vadd.f32 %v1562, %v1592
        %v1596 = vrot.slane %v1588, 2
        %v1598 = vadd.f32 %v1594, %v1596
        %v1599 = vadd.f32 %v1598, %v908
        %v1600 = vadd.f32 %v1599, %v1143
        %1601 = vst [vmem:[#allocation4] sm:$0x7] %v1600
        %v1602 = vld [vmem:[#allocation4] sm:$0x1]
        %v1603 = vld [vmem:[#allocation4 + $0x1] sm:$0x1]
        %v1604 = vld [vmem:[#allocation4 + $0x2] sm:$0x1]
        %v1605 = vmax.f32 %v1602, %v1603
        %v1606 = vmax.f32 %v1605, %v1604
        %v1607 = vmax.f32 %v1606, 0.0
        %v1608 = vpack.c.bf16 %v1607, %v1607
        %v1610 = vshll.u32 %v1608, 16
        %vm1613 = vmand %vm456, %vm1155
        %v1614 = vld [vmem:[#allocation3] sm:$0x1]
        %v1615 = vsel %vm1613, %v1610, %v1614
        %1616 = vst [vmem:[#allocation3] sm:$0x1] %v1615
        %vm1617 = vcmask 1041409
        %vm1618 = vsmask.f32 1280
        %vm1619 = vmand %vm1617, %vm1618
        %v1620 = vld [vmem:[#allocation3] sm:$0x2]
        %v1621 = vsel %vm1619, 0, %v1620
        %1622 = vst [vmem:[#allocation3] sm:$0x2] %v1621
        %v1623 = vld [vmem:[#allocation3] sm:$0x3]
        %v1624 = vld [vmem:[#allocation11] sm:$0xff]
        %v1625 = vld [vmem:[#allocation11 + $0x8] sm:$0xf]
        %v1626 = vld [vmem:[#allocation11 + $0xc] sm:$0xff]
        %v1627 = vld [vmem:[#allocation11 + $0x14] sm:$0xf]
        %v1628 = vld [vmem:[#allocation11 + $0x18] sm:$0xff]
        %v1629 = vld [vmem:[#allocation11 + $0x20] sm:$0xf]
        %v1630 = vld [vmem:[#allocation11 + $0x24] sm:$0xff]
        %v1631 = vld [vmem:[#allocation11 + $0x2c] sm:$0xf]
        %v1632 = vld [vmem:[#allocation11 + $0x30] sm:$0xff]
        %v1633 = vld [vmem:[#allocation11 + $0x38] sm:$0xf]
        %v1634 = vld [vmem:[#allocation11 + $0x3c] sm:$0xff]
        %v1635 = vld [vmem:[#allocation11 + $0x44] sm:$0xf]
        %v1636 = vld [vmem:[#allocation11 + $0x48] sm:$0xff]
        %v1637 = vld [vmem:[#allocation11 + $0x50] sm:$0xf]
        %v1638 = vld [vmem:[#allocation11 + $0x54] sm:$0xff]
        %v1639 = vld [vmem:[#allocation11 + $0x5c] sm:$0xf]
        %v1640 = vld [vmem:[#allocation11 + $0x60] sm:$0xff]
        %v1641 = vld [vmem:[#allocation11 + $0x68] sm:$0xf]
        %v1642 = vld [vmem:[#allocation11 + $0x6c] sm:$0xff]
        %v1643 = vld [vmem:[#allocation11 + $0x74] sm:$0xf]
        %v1644 = vld [vmem:[#allocation11 + $0x78] sm:$0xff]
        %v1645 = vld [vmem:[#allocation11 + $0x80] sm:$0xf]
        %v1646 = vld [vmem:[#allocation11 + $0x84] sm:$0xff]
        %v1647 = vld [vmem:[#allocation11 + $0x8c] sm:$0xf]
        %v1648 = vld [vmem:[#allocation11 + $0x90] sm:$0xff]
        %v1649 = vld [vmem:[#allocation11 + $0x98] sm:$0xf]
        %v1650 = vld [vmem:[#allocation11 + $0x9c] sm:$0xff]
        %v1651 = vld [vmem:[#allocation11 + $0xa4] sm:$0xf]
        %v1652 = vld [vmem:[#allocation11 + $0xa8] sm:$0xff]
        %v1653 = vld [vmem:[#allocation11 + $0xb0] sm:$0xf]
        %v1654 = vld [vmem:[#allocation11 + $0xb4] sm:$0xff]
        %v1655 = vld [vmem:[#allocation11 + $0xbc] sm:$0xf]
        %v1688 = vunpack.c.l.b16 %v1624
        %v1689 = vunpack.c.h.b16 %v1624
        %v1690 = vunpack.c.l.b16 %v1625
        %v1691 = vunpack.c.l.b16 %v1626
        %v1692 = vunpack.c.h.b16 %v1626
        %v1693 = vunpack.c.l.b16 %v1627
        %v1694 = vunpack.c.l.b16 %v1628
        %v1695 = vunpack.c.h.b16 %v1628
        %v1696 = vunpack.c.l.b16 %v1629
        %v1697 = vunpack.c.l.b16 %v1630
        %v1698 = vunpack.c.h.b16 %v1630
        %v1699 = vunpack.c.l.b16 %v1631
        %v1700 = vunpack.c.l.b16 %v1632
        %v1701 = vunpack.c.h.b16 %v1632
        %v1702 = vunpack.c.l.b16 %v1633
        %v1703 = vunpack.c.l.b16 %v1634
        %v1704 = vunpack.c.h.b16 %v1634
        %v1705 = vunpack.c.l.b16 %v1635
        %v1706 = vunpack.c.l.b16 %v1636
        %v1707 = vunpack.c.h.b16 %v1636
        %v1708 = vunpack.c.l.b16 %v1637
        %v1709 = vunpack.c.l.b16 %v1638
        %v1710 = vunpack.c.h.b16 %v1638
        %v1711 = vunpack.c.l.b16 %v1639
        %v1712 = vunpack.c.l.b16 %v1640
        %v1713 = vunpack.c.h.b16 %v1640
        %v1714 = vunpack.c.l.b16 %v1641
        %v1715 = vunpack.c.l.b16 %v1642
        %v1716 = vunpack.c.h.b16 %v1642
        %v1717 = vunpack.c.l.b16 %v1643
        %v1718 = vunpack.c.l.b16 %v1644
        %v1719 = vunpack.c.h.b16 %v1644
        %v1720 = vunpack.c.l.b16 %v1645
        %v1721 = vunpack.c.l.b16 %v1646
        %v1722 = vunpack.c.h.b16 %v1646
        %v1723 = vunpack.c.l.b16 %v1647
        %v1724 = vunpack.c.l.b16 %v1648
        %v1725 = vunpack.c.h.b16 %v1648
        %v1726 = vunpack.c.l.b16 %v1649
        %v1727 = vunpack.c.l.b16 %v1650
        %v1728 = vunpack.c.h.b16 %v1650
        %v1729 = vunpack.c.l.b16 %v1651
        %v1730 = vunpack.c.l.b16 %v1652
        %v1731 = vunpack.c.h.b16 %v1652
        %v1732 = vunpack.c.l.b16 %v1653
        %v1733 = vunpack.c.l.b16 %v1654
        %v1734 = vunpack.c.h.b16 %v1654
        %v1735 = vunpack.c.l.b16 %v1655
        %v1736 = vpack.c.b16 %v1691, %v1688
        %v1737 = vpack.c.b16 %v1692, %v1689
        %v1738 = vpack.c.b16 %v1693, %v1690
        %v1739 = vpack.c.b16 %v1697, %v1694
        %v1740 = vpack.c.b16 %v1698, %v1695
        %v1741 = vpack.c.b16 %v1699, %v1696
        %v1742 = vpack.c.b16 %v1703, %v1700
        %v1743 = vpack.c.b16 %v1704, %v1701
        %v1744 = vpack.c.b16 %v1705, %v1702
        %v1745 = vpack.c.b16 %v1709, %v1706
        %v1746 = vpack.c.b16 %v1710, %v1707
        %v1747 = vpack.c.b16 %v1711, %v1708
        %v1748 = vpack.c.b16 %v1715, %v1712
        %v1749 = vpack.c.b16 %v1716, %v1713
        %v1750 = vpack.c.b16 %v1717, %v1714
        %v1751 = vpack.c.b16 %v1721, %v1718
        %v1752 = vpack.c.b16 %v1722, %v1719
        %v1753 = vpack.c.b16 %v1723, %v1720
        %v1754 = vpack.c.b16 %v1727, %v1724
        %v1755 = vpack.c.b16 %v1728, %v1725
        %v1756 = vpack.c.b16 %v1729, %v1726
        %v1757 = vpack.c.b16 %v1733, %v1730
        %v1758 = vpack.c.b16 %v1734, %v1731
        %v1759 = vpack.c.b16 %v1735, %v1732
        %1784 = vmatpush.bf16.msra.mxu0 %v1757
        %1785 = vmatpush.bf16.msra.mxu0 %v1754
        %1786 = vmatpush.bf16.msra.mxu0 %v1751
        %1787 = vmatpush.bf16.msra.mxu0 %v1748
        %1788 = vmatpush.bf16.msra.mxu0 %v1745
        %1789 = vmatpush.bf16.msra.mxu0 %v1742
        %1790 = vmatpush.bf16.msra.mxu0 %v1739
        %1791 = vmatpush.bf16.msra.mxu0 %v1736
        %1792 = vmatmul.bf16.gmra.mxu0 %v1623
        %v1793 = vpop.f32.mrf.mxu0
        %v1794 = vadd.f32 0.0, %v1793
        %v1795 = vpop.f32.mrf.mxu0
        %1796 = vdwg.mxu0
        %1797 = vmatpush.bf16.msra.mxu0 %v1758
        %1798 = vmatpush.bf16.msra.mxu0 %v1755
        %1799 = vmatpush.bf16.msra.mxu0 %v1752
        %1800 = vmatpush.bf16.msra.mxu0 %v1749
        %1801 = vmatpush.bf16.msra.mxu0 %v1746
        %1802 = vmatpush.bf16.msra.mxu0 %v1743
        %1803 = vmatpush.bf16.msra.mxu0 %v1740
        %1804 = vmatpush.bf16.msra.mxu0 %v1737
        %1805 = vmatmul.bf16.gmra.mxu0 %v1623
        %v1806 = vpop.f32.mrf.mxu0
        %v1807 = vadd.f32 0.0, %v1806
        %v1808 = vpop.f32.mrf.mxu0
        %1809 = vdwg.mxu0
        %1810 = vmatpush.bf16.msra.mxu0 %v1759
        %1811 = vmatpush.bf16.msra.mxu0 %v1756
        %1812 = vmatpush.bf16.msra.mxu0 %v1753
        %1813 = vmatpush.bf16.msra.mxu0 %v1750
        %1814 = vmatpush.bf16.msra.mxu0 %v1747
        %1815 = vmatpush.bf16.msra.mxu0 %v1744
        %1816 = vmatpush.bf16.msra.mxu0 %v1741
        %1817 = vmatpush.bf16.msra.mxu0 %v1738
        %1818 = vmatmul.bf16.gmra.mxu0 %v1623
        %v1819 = vpop.f32.mrf.mxu0
        %v1820 = vadd.f32 0.0, %v1819
        %v1821 = vpop.f32.mrf.mxu0
        %1822 = vdwg.mxu0
        %v1824 = vrot.slane %v1807, 1
        %v1826 = vadd.f32 %v1794, %v1824
        %v1828 = vrot.slane %v1820, 2
        %v1830 = vadd.f32 %v1826, %v1828
        %v1831 = vadd.f32 %v1830, %v463
        %v1832 = vmax.f32 %v1831, 0.0
        %v1833 = vpack.c.bf16 %v1832, %v1832
        %v1835 = vshll.u32 %v1833, 16
        %v1838 = vld [vmem:[#allocation3] sm:$0x1]
        %v1839 = vsel %vm1613, %v1835, %v1838
        %1840 = vst [vmem:[#allocation3] sm:$0x1] %v1839
        %v1841 = vld [vmem:[#allocation3] sm:$0x2]
        %v1842 = vsel %vm1619, 0, %v1841
        %1843 = vst [vmem:[#allocation3] sm:$0x2] %v1842
        %v1844 = vld [vmem:[#allocation3] sm:$0x3]
        %v1845 = vld [vmem:[#allocation11] sm:$0xff]
        %v1846 = vld [vmem:[#allocation11 + $0x8] sm:$0xf]
        %v1847 = vld [vmem:[#allocation11 + $0xc] sm:$0xff]
        %v1848 = vld [vmem:[#allocation11 + $0x14] sm:$0xf]
        %v1849 = vld [vmem:[#allocation11 + $0x18] sm:$0xff]
        %v1850 = vld [vmem:[#allocation11 + $0x20] sm:$0xf]
        %v1851 = vld [vmem:[#allocation11 + $0x24] sm:$0xff]
        %v1852 = vld [vmem:[#allocation11 + $0x2c] sm:$0xf]
        %v1853 = vld [vmem:[#allocation11 + $0x30] sm:$0xff]
        %v1854 = vld [vmem:[#allocation11 + $0x38] sm:$0xf]
        %v1855 = vld [vmem:[#allocation11 + $0x3c] sm:$0xff]
        %v1856 = vld [vmem:[#allocation11 + $0x44] sm:$0xf]
        %v1857 = vld [vmem:[#allocation11 + $0x48] sm:$0xff]
        %v1858 = vld [vmem:[#allocation11 + $0x50] sm:$0xf]
        %v1859 = vld [vmem:[#allocation11 + $0x54] sm:$0xff]
        %v1860 = vld [vmem:[#allocation11 + $0x5c] sm:$0xf]
        %v1861 = vld [vmem:[#allocation11 + $0x60] sm:$0xff]
        %v1862 = vld [vmem:[#allocation11 + $0x68] sm:$0xf]
        %v1863 = vld [vmem:[#allocation11 + $0x6c] sm:$0xff]
        %v1864 = vld [vmem:[#allocation11 + $0x74] sm:$0xf]
        %v1865 = vld [vmem:[#allocation11 + $0x78] sm:$0xff]
        %v1866 = vld [vmem:[#allocation11 + $0x80] sm:$0xf]
        %v1867 = vld [vmem:[#allocation11 + $0x84] sm:$0xff]
        %v1868 = vld [vmem:[#allocation11 + $0x8c] sm:$0xf]
        %v1869 = vld [vmem:[#allocation11 + $0x90] sm:$0xff]
        %v1870 = vld [vmem:[#allocation11 + $0x98] sm:$0xf]
        %v1871 = vld [vmem:[#allocation11 + $0x9c] sm:$0xff]
        %v1872 = vld [vmem:[#allocation11 + $0xa4] sm:$0xf]
        %v1873 = vld [vmem:[#allocation11 + $0xa8] sm:$0xff]
        %v1874 = vld [vmem:[#allocation11 + $0xb0] sm:$0xf]
        %v1875 = vld [vmem:[#allocation11 + $0xb4] sm:$0xff]
        %v1876 = vld [vmem:[#allocation11 + $0xbc] sm:$0xf]
        %v1909 = vunpack.c.l.b16 %v1845
        %v1910 = vunpack.c.h.b16 %v1845
        %v1911 = vunpack.c.l.b16 %v1846
        %v1912 = vunpack.c.l.b16 %v1847
        %v1913 = vunpack.c.h.b16 %v1847
        %v1914 = vunpack.c.l.b16 %v1848
        %v1915 = vunpack.c.l.b16 %v1849
        %v1916 = vunpack.c.h.b16 %v1849
        %v1917 = vunpack.c.l.b16 %v1850
        %v1918 = vunpack.c.l.b16 %v1851
        %v1919 = vunpack.c.h.b16 %v1851
        %v1920 = vunpack.c.l.b16 %v1852
        %v1921 = vunpack.c.l.b16 %v1853
        %v1922 = vunpack.c.h.b16 %v1853
        %v1923 = vunpack.c.l.b16 %v1854
        %v1924 = vunpack.c.l.b16 %v1855
        %v1925 = vunpack.c.h.b16 %v1855
        %v1926 = vunpack.c.l.b16 %v1856
        %v1927 = vunpack.c.l.b16 %v1857
        %v1928 = vunpack.c.h.b16 %v1857
        %v1929 = vunpack.c.l.b16 %v1858
        %v1930 = vunpack.c.l.b16 %v1859
        %v1931 = vunpack.c.h.b16 %v1859
        %v1932 = vunpack.c.l.b16 %v1860
        %v1933 = vunpack.c.l.b16 %v1861
        %v1934 = vunpack.c.h.b16 %v1861
        %v1935 = vunpack.c.l.b16 %v1862
        %v1936 = vunpack.c.l.b16 %v1863
        %v1937 = vunpack.c.h.b16 %v1863
        %v1938 = vunpack.c.l.b16 %v1864
        %v1939 = vunpack.c.l.b16 %v1865
        %v1940 = vunpack.c.h.b16 %v1865
        %v1941 = vunpack.c.l.b16 %v1866
        %v1942 = vunpack.c.l.b16 %v1867
        %v1943 = vunpack.c.h.b16 %v1867
        %v1944 = vunpack.c.l.b16 %v1868
        %v1945 = vunpack.c.l.b16 %v1869
        %v1946 = vunpack.c.h.b16 %v1869
        %v1947 = vunpack.c.l.b16 %v1870
        %v1948 = vunpack.c.l.b16 %v1871
        %v1949 = vunpack.c.h.b16 %v1871
        %v1950 = vunpack.c.l.b16 %v1872
        %v1951 = vunpack.c.l.b16 %v1873
        %v1952 = vunpack.c.h.b16 %v1873
        %v1953 = vunpack.c.l.b16 %v1874
        %v1954 = vunpack.c.l.b16 %v1875
        %v1955 = vunpack.c.h.b16 %v1875
        %v1956 = vunpack.c.l.b16 %v1876
        %v1957 = vpack.c.b16 %v1912, %v1909
        %v1958 = vpack.c.b16 %v1913, %v1910
        %v1959 = vpack.c.b16 %v1914, %v1911
        %v1960 = vpack.c.b16 %v1918, %v1915
        %v1961 = vpack.c.b16 %v1919, %v1916
        %v1962 = vpack.c.b16 %v1920, %v1917
        %v1963 = vpack.c.b16 %v1924, %v1921
        %v1964 = vpack.c.b16 %v1925, %v1922
        %v1965 = vpack.c.b16 %v1926, %v1923
        %v1966 = vpack.c.b16 %v1930, %v1927
        %v1967 = vpack.c.b16 %v1931, %v1928
        %v1968 = vpack.c.b16 %v1932, %v1929
        %v1969 = vpack.c.b16 %v1936, %v1933
        %v1970 = vpack.c.b16 %v1937, %v1934
        %v1971 = vpack.c.b16 %v1938, %v1935
        %v1972 = vpack.c.b16 %v1942, %v1939
        %v1973 = vpack.c.b16 %v1943, %v1940
        %v1974 = vpack.c.b16 %v1944, %v1941
        %v1975 = vpack.c.b16 %v1948, %v1945
        %v1976 = vpack.c.b16 %v1949, %v1946
        %v1977 = vpack.c.b16 %v1950, %v1947
        %v1978 = vpack.c.b16 %v1954, %v1951
        %v1979 = vpack.c.b16 %v1955, %v1952
        %v1980 = vpack.c.b16 %v1956, %v1953
        %2005 = vmatpush.bf16.msra.mxu0 %v1978
        %2006 = vmatpush.bf16.msra.mxu0 %v1975
        %2007 = vmatpush.bf16.msra.mxu0 %v1972
        %2008 = vmatpush.bf16.msra.mxu0 %v1969
        %2009 = vmatpush.bf16.msra.mxu0 %v1966
        %2010 = vmatpush.bf16.msra.mxu0 %v1963
        %2011 = vmatpush.bf16.msra.mxu0 %v1960
        %2012 = vmatpush.bf16.msra.mxu0 %v1957
        %2013 = vmatmul.bf16.gmra.mxu0 %v1844
        %v2014 = vpop.f32.mrf.mxu0
        %v2015 = vadd.f32 0.0, %v2014
        %v2016 = vpop.f32.mrf.mxu0
        %2017 = vdwg.mxu0
        %2018 = vmatpush.bf16.msra.mxu0 %v1979
        %2019 = vmatpush.bf16.msra.mxu0 %v1976
        %2020 = vmatpush.bf16.msra.mxu0 %v1973
        %2021 = vmatpush.bf16.msra.mxu0 %v1970
        %2022 = vmatpush.bf16.msra.mxu0 %v1967
        %2023 = vmatpush.bf16.msra.mxu0 %v1964
        %2024 = vmatpush.bf16.msra.mxu0 %v1961
        %2025 = vmatpush.bf16.msra.mxu0 %v1958
        %2026 = vmatmul.bf16.gmra.mxu0 %v1844
        %v2027 = vpop.f32.mrf.mxu0
        %v2028 = vadd.f32 0.0, %v2027
        %v2029 = vpop.f32.mrf.mxu0
        %2030 = vdwg.mxu0
        %2031 = vmatpush.bf16.msra.mxu0 %v1980
        %2032 = vmatpush.bf16.msra.mxu0 %v1977
        %2033 = vmatpush.bf16.msra.mxu0 %v1974
        %2034 = vmatpush.bf16.msra.mxu0 %v1971
        %2035 = vmatpush.bf16.msra.mxu0 %v1968
        %2036 = vmatpush.bf16.msra.mxu0 %v1965
        %2037 = vmatpush.bf16.msra.mxu0 %v1962
        %2038 = vmatpush.bf16.msra.mxu0 %v1959
        %2039 = vmatmul.bf16.gmra.mxu0 %v1844
        %v2040 = vpop.f32.mrf.mxu0
        %v2041 = vadd.f32 0.0, %v2040
        %v2042 = vpop.f32.mrf.mxu0
        %2043 = vdwg.mxu0
        %v2045 = vrot.slane %v2028, 1
        %v2047 = vadd.f32 %v2015, %v2045
        %v2049 = vrot.slane %v2041, 2
        %v2051 = vadd.f32 %v2047, %v2049
        %v2052 = vadd.f32 %v2051, %v463
        %v2053 = vadd.f32 %v2052, %v1606
        %v2054 = vpack.c.bf16 %v2053, %v2053
        %v2055 = vld [vmem:[#allocation13] sm:$0xf]
        %v2056 = vld [vmem:[#allocation13 + $0x4] sm:$0xf]
        %v2057 = vld [vmem:[#allocation13 + $0x8] sm:$0xf]
        %v2058 = vld [vmem:[#allocation13 + $0xc] sm:$0xf]
        %v2059 = vld [vmem:[#allocation13 + $0x10] sm:$0xf]
        %v2060 = vld [vmem:[#allocation13 + $0x14] sm:$0xf]
        %v2061 = vld [vmem:[#allocation13 + $0x18] sm:$0xf]
        %v2062 = vld [vmem:[#allocation13 + $0x1c] sm:$0xf]
        %v2063 = vld [vmem:[#allocation13 + $0x20] sm:$0xf]
        %v2064 = vld [vmem:[#allocation13 + $0x24] sm:$0xf]
        %v2065 = vld [vmem:[#allocation13 + $0x28] sm:$0xf]
        %v2066 = vld [vmem:[#allocation13 + $0x2c] sm:$0xf]
        %v2067 = vld [vmem:[#allocation13 + $0x30] sm:$0xf]
        %v2068 = vld [vmem:[#allocation13 + $0x34] sm:$0xf]
        %v2069 = vld [vmem:[#allocation13 + $0x38] sm:$0xf]
        %v2070 = vld [vmem:[#allocation13 + $0x3c] sm:$0xf]
        %v2071 = vld [vmem:[#allocation13 + $0x40] sm:$0xf]
        %v2072 = vld [vmem:[#allocation13 + $0x44] sm:$0xf]
        %v2073 = vld [vmem:[#allocation13 + $0x48] sm:$0xf]
        %v2074 = vld [vmem:[#allocation13 + $0x4c] sm:$0xf]
        %v2075 = vld [vmem:[#allocation13 + $0x50] sm:$0xf]
        %v2076 = vld [vmem:[#allocation13 + $0x54] sm:$0xf]
        %v2077 = vld [vmem:[#allocation13 + $0x58] sm:$0xf]
        %v2078 = vld [vmem:[#allocation13 + $0x5c] sm:$0xf]
        %v2079 = vld [vmem:[#allocation13 + $0x60] sm:$0xf]
        %v2080 = vld [vmem:[#allocation13 + $0x64] sm:$0xf]
        %v2081 = vld [vmem:[#allocation13 + $0x68] sm:$0xf]
        %v2082 = vld [vmem:[#allocation13 + $0x6c] sm:$0xf]
        %v2083 = vld [vmem:[#allocation13 + $0x70] sm:$0xf]
        %v2084 = vld [vmem:[#allocation13 + $0x74] sm:$0xf]
        %v2085 = vld [vmem:[#allocation13 + $0x78] sm:$0xf]
        %v2086 = vld [vmem:[#allocation13 + $0x7c] sm:$0xf]
        %v2087 = vld [vmem:[%s7] sm:$0x1]
        %v2120 = vunpack.c.l.b16 %v2055
        %v2121 = vunpack.c.l.b16 %v2056
        %v2122 = vunpack.c.l.b16 %v2057
        %v2123 = vunpack.c.l.b16 %v2058
        %v2124 = vunpack.c.l.b16 %v2059
        %v2125 = vunpack.c.l.b16 %v2060
        %v2126 = vunpack.c.l.b16 %v2061
        %v2127 = vunpack.c.l.b16 %v2062
        %v2128 = vunpack.c.l.b16 %v2063
        %v2129 = vunpack.c.l.b16 %v2064
        %v2130 = vunpack.c.l.b16 %v2065
        %v2131 = vunpack.c.l.b16 %v2066
        %v2132 = vunpack.c.l.b16 %v2067
        %v2133 = vunpack.c.l.b16 %v2068
        %v2134 = vunpack.c.l.b16 %v2069
        %v2135 = vunpack.c.l.b16 %v2070
        %v2136 = vunpack.c.l.b16 %v2071
        %v2137 = vunpack.c.l.b16 %v2072
        %v2138 = vunpack.c.l.b16 %v2073
        %v2139 = vunpack.c.l.b16 %v2074
        %v2140 = vunpack.c.l.b16 %v2075
        %v2141 = vunpack.c.l.b16 %v2076
        %v2142 = vunpack.c.l.b16 %v2077
        %v2143 = vunpack.c.l.b16 %v2078
        %v2144 = vunpack.c.l.b16 %v2079
        %v2145 = vunpack.c.l.b16 %v2080
        %v2146 = vunpack.c.l.b16 %v2081
        %v2147 = vunpack.c.l.b16 %v2082
        %v2148 = vunpack.c.l.b16 %v2083
        %v2149 = vunpack.c.l.b16 %v2084
        %v2150 = vunpack.c.l.b16 %v2085
        %v2151 = vunpack.c.l.b16 %v2086
        %v2152 = vpack.c.b16 %v2121, %v2120
        %v2153 = vpack.c.b16 %v2123, %v2122
        %v2154 = vpack.c.b16 %v2125, %v2124
        %v2155 = vpack.c.b16 %v2127, %v2126
        %v2156 = vpack.c.b16 %v2129, %v2128
        %v2157 = vpack.c.b16 %v2131, %v2130
        %v2158 = vpack.c.b16 %v2133, %v2132
        %v2159 = vpack.c.b16 %v2135, %v2134
        %v2160 = vpack.c.b16 %v2137, %v2136
        %v2161 = vpack.c.b16 %v2139, %v2138
        %v2162 = vpack.c.b16 %v2141, %v2140
        %v2163 = vpack.c.b16 %v2143, %v2142
        %v2164 = vpack.c.b16 %v2145, %v2144
        %v2165 = vpack.c.b16 %v2147, %v2146
        %v2166 = vpack.c.b16 %v2149, %v2148
        %v2167 = vpack.c.b16 %v2151, %v2150
        %2184 = vmatpush.bf16.msra.mxu0 %v2159
        %2185 = vmatpush.bf16.msra.mxu0 %v2158
        %2186 = vmatpush.bf16.msra.mxu0 %v2157
        %2187 = vmatpush.bf16.msra.mxu0 %v2156
        %2188 = vmatpush.bf16.msra.mxu0 %v2155
        %2189 = vmatpush.bf16.msra.mxu0 %v2154
        %2190 = vmatpush.bf16.msra.mxu0 %v2153
        %2191 = vmatpush.bf16.msra.mxu0 %v2152
        %2192 = vmatmul.bf16.gmra.mxu0 %v2054
        %v2193 = vpop.f32.mrf.mxu0
        %v2194 = vadd.f32 %v2087, %v2193
        %v2195 = vpop.f32.mrf.mxu0
        %2196 = vdwg.mxu0
        %2197 = vmatpush.bf16.msra.mxu0 %v2167
        %2198 = vmatpush.bf16.msra.mxu0 %v2166
        %2199 = vmatpush.bf16.msra.mxu0 %v2165
        %2200 = vmatpush.bf16.msra.mxu0 %v2164
        %2201 = vmatpush.bf16.msra.mxu0 %v2163
        %2202 = vmatpush.bf16.msra.mxu0 %v2162
        %2203 = vmatpush.bf16.msra.mxu0 %v2161
        %2204 = vmatpush.bf16.msra.mxu0 %v2160
        %2205 = vmatmul.bf16.gmra.mxu0 %v2054
        %v2206 = vpop.f32.mrf.mxu0
        %v2207 = vadd.f32 %v2194, %v2206
        %v2208 = vpop.f32.mrf.mxu0
        %2209 = vdwg.mxu0
        %2210 = vst [vmem:[%s288] sm:$0x1] %v2207
        %s2211 = sand.u32 %s166, 1
        %s2212 = scalar_lea.sflag [#allocation10], %s2211
        %s2213 = sand.u32 %s166, 1
        %s2214 = scalar_lea.vmem [#allocation14], %s2213
        // Predicated region
        $region89: #{tpu_custom_call.1} parent=43 // pred_check
          %p2215 = pneg %p176
        $region90: #{tpu_custom_call.1} parent=43 // pred_check_branch
          %2217 = sbr.rel (%p2215) target = $region92
        $region91: #{tpu_custom_call.1} parent=43 // pred_region
          %2219 = vsyncadd %s2212, 0
          %s2220 = scalar_lea.hbm %s8, %s32
          %s2222 = sshll.u32 %s2214, 4
          %s2223 = int_to_ptr.vmem [resolvable:$true] %s2222
          %s2224 = sshll.u32 %s2220, 4
          %s2225 = int_to_ptr.hbm [resolvable:$true] %s2224
          %2227 = dma.vmem_to_hbm [thread:$0]  %s2223, 16, %s2225, %s2212
        $region92: #{tpu_custom_call.1} parent=43 // pred_fallthru
          _
      $region44: #{tpu_custom_call.1} parent=5 // pred_fallthru
        _
      %p2228 = scmp.le.s32.totalorder 2, %s27
      // Predicated region
      $region93: #{tpu_custom_call.1} parent=5 // pred_check
        %p2229 = pneg %p2228
      $region94: #{tpu_custom_call.1} parent=5 // pred_check_branch
        %2231 = sbr.rel (%p2229) target = $region96
      $region95: #{tpu_custom_call.1} parent=5 // pred_region
        %s2232 = ssub.s32 %s27, 2
        // Predicated region
        $region97: #{tpu_custom_call.1} parent=95 // pred_check
          %p2233 = pneg %p182
        $region98: #{tpu_custom_call.1} parent=95 // pred_check_branch
          %2235 = sbr.rel (%p2233) target = $region100
        $region99: #{tpu_custom_call.1} parent=95 // pred_region
          %s2236 = sand.u32 %s167, 1
          %s2237 = scalar_lea.sflag [#allocation10], %s2236
          %s2238 = sand.u32 %s167, 1
          %s2239 = scalar_lea.vmem [#allocation14], %s2238
          %2241 = dma.done %s2237, 16
        $region100: #{tpu_custom_call.1} parent=95 // pred_fallthru
          _
      $region96: #{tpu_custom_call.1} parent=5 // pred_fallthru
        _
    $region6: #{tpu_custom_call.1} parent=1 // loop_footer
      %s31 = sadd.s32 1, %s27
    $region7: #{tpu_custom_call.1} parent=1 // loop_footer_branch
      %26 = sbr.rel target = $region3
    $region8: #{tpu_custom_call.1} parent=1 // loop_exit
      _
    %2242 = vsyncpa [#allocation9], 1
    %s2243 = scalar_lea.sflag [#allocation9], 1
    %2244 = vsyncpa %s2243, 1
    %2245 = vsyncpa [#allocation12], 1
    %2246 = vsyncpa [#allocation10], 1
    %s2247 = scalar_lea.sflag [#allocation10], 1
    %2248 = vsyncpa %s2247, 1
  %2249 = vsyncmov [#allocation5]
  %s2250 = vpop.sfrf %2249
  %p2251 = scmp.eq.s32.totalorder %s2250, 0
  %p2252 = pneg %p2251
  %2254 = shalt.err (%p2252)
  %s2255 = scalar_lea.sflag [#allocation5], 1
  %2256 = vsyncmov %s2255
  %s2257 = vpop.sfrf %2256
  %p2258 = scmp.eq.s32.totalorder %s2257, 0
  %p2259 = pneg %p2258
  %2261 = shalt.err (%p2259)
  %s2262 = scalar_lea.sflag [#allocation5], 2
  %2263 = vsyncmov %s2262
  %s2264 = vpop.sfrf %2263
  %p2265 = scmp.eq.s32.totalorder %s2264, 0
  %p2266 = pneg %p2265
  %2268 = shalt.err (%p2266)
  %s2269 = scalar_lea.sflag [#allocation5], 3
  %2270 = vsyncmov %s2269
  %s2271 = vpop.sfrf %2270
  %p2272 = scmp.eq.s32.totalorder %s2271, 0
  %p2273 = pneg %p2272
  %2275 = shalt.err (%p2273)
  %s2276 = scalar_lea.sflag [#allocation5], 4
  %2277 = vsyncmov %s2276
  %s2278 = vpop.sfrf %2277
  %p2279 = scmp.eq.s32.totalorder %s2278, 0
  %p2280 = pneg %p2279
  %2282 = shalt.err (%p2280)
  %s2283 = scalar_lea.sflag [#allocation5], 5
  %2284 = vsyncmov %s2283
  %s2285 = vpop.sfrf %2284
  %p2286 = scmp.eq.s32.totalorder %s2285, 0
  %p2287 = pneg %p2286
  %2289 = shalt.err (%p2287)
  %s2290 = scalar_lea.sflag [#allocation5], 6
  %2291 = vsyncmov %s2290
  %s2292 = vpop.sfrf %2291
  %p2293 = scmp.eq.s32.totalorder %s2292, 0
  %p2294 = pneg %p2293
  %2296 = shalt.err (%p2294)
  %s2297 = scalar_lea.sflag [#allocation5], 7
  %2298 = vsyncmov %s2297
  %s2299 = vpop.sfrf %2298
  %p2300 = scmp.eq.s32.totalorder %s2299, 0
  %p2301 = pneg %p2300
  %2303 = shalt.err (%p2301)

</llo_original>
